<compile_context>
chip_gen: v5e
topology: v5e:2x2
jax: 0.10.0
libtpu: 0.0.40
codegen_flags: <defaults>
</compile_context>

<pallas_src>
import functools
import math

import jax
import jax.numpy as jnp
from jax import lax
from jax.experimental import pallas as pl
from jax.experimental.pallas import tpu as pltpu


def _layer_norm(x, g, b, eps=1e-5):
    mu = jnp.mean(x, axis=-1, keepdims=True)
    var = jnp.mean((x - mu) ** 2, axis=-1, keepdims=True)
    return (x - mu) * lax.rsqrt(var + eps) * g + b


def _stack_kernel(lens_ref,                                # SMEM (B,) i32, scalar-prefetched
                  x_ref, wqkv_ref, wo_ref, w1_ref, w2_ref,
                  vech_ref, b1_ref, lnf_ref,
                  out_ref, x_carry,
                  *, causal, approx_recip):
    l = pl.program_id(1)
    n_layers = pl.num_programs(1)
    Bt, S, H = x_ref.shape
    M = Bt * S
    scale = 1.0 / math.sqrt(float(H))

    # Initialize the residual carry from the input embeddings at layer 0 of
    # this batch block.
    @pl.when(l == 0)
    def _():
        x_carry[...] = x_ref[...].reshape(M, H).astype(jnp.float32)

    x = x_carry[...]                                       # (M, H) f32 residual stream

    # Packed per-layer vectors: [ln1g, ln1b, ln2g, ln2b, bq, bk, bv, bo, b2]
    vech = vech_ref[0]                                     # (9, H) f32
    ln1g, ln1b = vech[0:1, :], vech[1:2, :]
    ln2g, ln2b = vech[2:3, :], vech[3:4, :]
    bq, bk, bv = vech[4:5, :], vech[5:6, :], vech[6:7, :]
    bo, b2 = vech[7:8, :], vech[8:9, :]

    # ---- attention mask, generated in-kernel (no (B,S,S) HBM traffic) ----
    b0 = pl.program_id(0) * Bt
    col = lax.broadcasted_iota(jnp.int32, (S, S), 1)
    row = lax.broadcasted_iota(jnp.int32, (S, S), 0)
    masks = []
    for i in range(Bt):                                    # Bt is small & static
        ok = col < lens_ref[b0 + i]                        # key-padding mask
        if causal:
            ok = jnp.logical_and(ok, col <= row)
        masks.append(ok)
    valid = jnp.stack(masks, axis=0)                       # (Bt, S, S) bool

    # ---- self-attention sublayer (pre-norm), fused QKV projection ----
    h = _layer_norm(x, ln1g, ln1b).astype(jnp.bfloat16)
    qkv = jnp.dot(h, wqkv_ref[0], preferred_element_type=jnp.float32)   # (M, 3H)
    q = (qkv[:, 0:H] + bq) * scale                         # fold 1/sqrt(H) into q
    k = qkv[:, H:2 * H] + bk
    v = qkv[:, 2 * H:3 * H] + bv
    qb = q.astype(jnp.bfloat16).reshape(Bt, S, H)
    kb = k.astype(jnp.bfloat16).reshape(Bt, S, H)
    vb = v.astype(jnp.bfloat16).reshape(Bt, S, H)

    s = jnp.einsum("bqd,bkd->bqk", qb, kb, preferred_element_type=jnp.float32)
    s = jnp.where(valid, s, jnp.float32(-1e30))
    s = s - jnp.max(s, axis=-1, keepdims=True)
    p = jnp.exp(s)
    denom = jnp.sum(p, axis=-1, keepdims=True)             # (Bt, S, 1)
    a = jnp.einsum("bqk,bkd->bqd", p.astype(jnp.bfloat16), vb,
                   preferred_element_type=jnp.float32)
    # Deferred softmax normalization: multiply on (S, H) instead of (S, S).
    if approx_recip:
        a = a * pl.reciprocal(denom, approx=True)          # EUP slot, ~free
    else:
        a = a / denom
    a = a.reshape(M, H)
    x = x + jnp.dot(a.astype(jnp.bfloat16), wo_ref[0],
                    preferred_element_type=jnp.float32) + bo

    # ---- feed-forward sublayer (pre-norm) ----
    h2 = _layer_norm(x, ln2g, ln2b).astype(jnp.bfloat16)
    ff = jnp.maximum(
        jnp.dot(h2, w1_ref[0], preferred_element_type=jnp.float32) + b1_ref[0],
        0.0)
    x = x + jnp.dot(ff.astype(jnp.bfloat16), w2_ref[0],
                    preferred_element_type=jnp.float32) + b2

    x_carry[...] = x

    # Stack-level LayerNorm (self.norm) after the last layer.
    @pl.when(l == n_layers - 1)
    def _():
        out = _layer_norm(x, lnf_ref[0:1, :], lnf_ref[1:2, :])
        out_ref[...] = out.reshape(Bt, S, H).astype(out_ref.dtype)


def _pick_block_batch(B, S, target_rows=256, max_rows=2048):
    """Largest divisor of B whose Bt*S fits the row budget, but no larger than
    needed to reach target_rows (keeps >=2 batch blocks on the parallel axis
    for v7x's two TensorCores whenever the batch allows it)."""
    best = 1
    for bt in range(1, B + 1):
        if B % bt or bt * S > max_rows:
            continue
        best = bt
        if bt * S >= target_rows:
            break
    return best


def _vmem_limit_bytes():
    # Generation-aware VMEM budget: ~54 MiB on v7x (64 MiB physical),
    # ~108 MiB on v5e/v6e (128 MiB physical).
    try:
        cap = int(pltpu.get_tpu_info().vmem_capacity_bytes)
    except Exception:  # pragma: no cover - conservative fallback
        cap = 64 * 1024 * 1024
    return min(int(cap * 0.85), 110 * 1024 * 1024)


def transformer_stack(x, lens, params, *, causal=True, approx_recip=True):
    """x: (B, S, H) f32, lens: (B,) int32 valid key lengths -> (B, S, H) f32.

    approx_recip=True uses pl.reciprocal(approx=True) for the softmax
    denominator (bf16-level accuracy knob); set False for an exact divide.
    """
    B, S, H = x.shape
    L, _, FF = params["w1"].shape
    assert params["wqkv"].shape == (L, H, 3 * H)
    assert H % 128 == 0, "hidden must be a multiple of 128 (lane-dense)"
    assert S % 8 == 0, "sequence length must be a multiple of 8 (sublanes)"

    Bt = _pick_block_batch(B, S)
    n_bblocks = B // Bt

    weight_names = ["wqkv", "wo", "w1", "w2", "vec_h", "b1"]
    weights = [params[n] for n in weight_names]

    def per_layer_spec(arr):
        nd = arr.ndim
        blk = (1,) + arr.shape[1:]
        # Stream one layer's weights per grid step (double-buffered by Pallas).
        return pl.BlockSpec(blk, lambda b, l, lens, _nd=nd: (l,) + (0,) * (_nd - 1))

    in_specs = [pl.BlockSpec((Bt, S, H), lambda b, l, lens: (b, 0, 0))]   # embeddings
    in_specs += [per_layer_spec(w) for w in weights]                       # per-layer weights
    in_specs.append(pl.BlockSpec(params["lnf"].shape,                      # stack-level LN
                                 lambda b, l, lens: (0, 0)))

    out_spec = pl.BlockSpec((Bt, S, H), lambda b, l, lens: (b, 0, 0))

    # Advisory cost estimate (weights streamed once per batch *block* now).
    flops = 2 * B * L * S * (4 * H * H + 2 * S * H + 2 * H * FF)
    transcendentals = B * L * (S * S + 2 * S) + B * S
    bytes_weights = n_bblocks * sum(
        int(w.size) * w.dtype.itemsize for w in weights + [params["lnf"]])
    bytes_acts = 2 * int(x.size) * 4
    cost = pl.CostEstimate(flops=int(flops),
                           transcendentals=int(transcendentals),
                           bytes_accessed=int(bytes_weights + bytes_acts))

    kernel = functools.partial(_stack_kernel, causal=causal,
                               approx_recip=approx_recip)

    grid_spec = pltpu.PrefetchScalarGridSpec(
        num_scalar_prefetch=1,                     # lens -> SMEM
        grid=(n_bblocks, L),                       # layer axis MUST stay innermost
        in_specs=in_specs,
        out_specs=out_spec,
        scratch_shapes=[pltpu.VMEM((Bt * S, H), jnp.float32)],   # residual carry
    )

    return pl.pallas_call(
        kernel,
        out_shape=jax.ShapeDtypeStruct((B, S, H), jnp.float32),
        grid_spec=grid_spec,
        compiler_params=pltpu.CompilerParams(
            dimension_semantics=("parallel", "arbitrary"),
            vmem_limit_bytes=_vmem_limit_bytes(),
        ),
        cost_estimate=cost,
    )(lens.astype(jnp.int32), x, *weights, params["lnf"])


def init_params(key, n_layers, hidden, ff):
    ks = jax.random.split(key, 6)
    scale = 0.02

    def nrm(k, shape):
        # bf16 weights (halve HBM traffic / VMEM); f32 accumulation in-kernel.
        return (scale * jax.random.normal(k, shape, dtype=jnp.float32)
                ).astype(jnp.bfloat16)

    # Packed per-layer H-sized vectors: [ln1g, ln1b, ln2g, ln2b, bq, bk, bv, bo, b2]
    vec_h = jnp.zeros((n_layers, 9, hidden), jnp.float32)
    vec_h = vec_h.at[:, 0, :].set(1.0)     # ln1 gamma
    vec_h = vec_h.at[:, 2, :].set(1.0)     # ln2 gamma
    vec_h = vec_h.at[:, 4:9, :].set(
        scale * jax.random.normal(ks[4], (n_layers, 5, hidden), jnp.float32))

    params = {
        "wqkv": nrm(ks[0], (n_layers, hidden, 3 * hidden)),   # fused Wq|Wk|Wv
        "wo":   nrm(ks[1], (n_layers, hidden, hidden)),
        "w1":   nrm(ks[2], (n_layers, hidden, ff)),
        "w2":   nrm(ks[3], (n_layers, ff, hidden)),
        "vec_h": vec_h,
        "b1": scale * jax.random.normal(ks[5], (n_layers, 1, ff), jnp.float32),
        "lnf": jnp.concatenate([jnp.ones((1, hidden), jnp.float32),
                                jnp.zeros((1, hidden), jnp.float32)], axis=0),
    }
    return params


def reference_stack(x, lens, params, causal=True):
    """Pure-JAX f32 reference (uses the same bf16-quantized weight values)."""
    def ln(x, g, b, eps=1e-5):
        mu = x.mean(-1, keepdims=True)
        var = ((x - mu) ** 2).mean(-1, keepdims=True)
        return (x - mu) / jnp.sqrt(var + eps) * g + b

    f32 = lambda a: a.astype(jnp.float32)
    L = params["wqkv"].shape[0]
    B, S, H = x.shape

    col = jnp.arange(S)[None, None, :]
    row = jnp.arange(S)[None, :, None]
    valid = col < lens[:, None, None]
    if causal:
        valid = valid & (col <= row)

    for l in range(L):
        v_h = params["vec_h"][l]
        ln1g, ln1b, ln2g, ln2b = v_h[0], v_h[1], v_h[2], v_h[3]
        bq, bk, bv, bo, b2 = v_h[4], v_h[5], v_h[6], v_h[7], v_h[8]
        wqkv = f32(params["wqkv"][l])

        h = ln(x, ln1g, ln1b)
        q = h @ wqkv[:, 0:H] + bq
        k = h @ wqkv[:, H:2 * H] + bk
        v = h @ wqkv[:, 2 * H:3 * H] + bv
        s = jnp.einsum("bqd,bkd->bqk", q, k) / jnp.sqrt(jnp.float32(H))
        s = jnp.where(valid, s, -1e30)
        p = jax.nn.softmax(s, axis=-1)
        a = jnp.einsum("bqk,bkd->bqd", p, v)
        x = x + a @ f32(params["wo"][l]) + bo

        h2 = ln(x, ln2g, ln2b)
        ff = jnp.maximum(h2 @ f32(params["w1"][l]) + params["b1"][l, 0], 0.0)
        x = x + ff @ f32(params["w2"][l]) + b2
    return ln(x, params["lnf"][0], params["lnf"][1])


if __name__ == "__main__":
    # Lane-dense small config: H, FF multiples of 128; S multiple of 8.
    B, S, H, FF, L = 4, 16, 128, 256, 3

    key = jax.random.PRNGKey(0)
    k_x, k_p = jax.random.split(key)
    x = jax.random.normal(k_x, (B, S, H), dtype=jnp.float32)
    # Per-batch valid key lengths (encoder padding mask) + causal masking.
    lens = jnp.array([S, 12, S, 9], dtype=jnp.int32)
    params = init_params(k_p, L, H, FF)

    out = jax.block_until_ready(transformer_stack(x, lens, params, causal=True))
    ref = reference_stack(x, lens, params, causal=True)

    assert out.shape == (B, S, H)
    # bf16 MXU operands + approx reciprocal => tolerance at bf16 precision.
    err = float(jnp.max(jnp.abs(out - ref)))
    assert jnp.allclose(out, ref, atol=3e-2, rtol=3e-2), (
        f"mismatch vs reference: max abs err {err}")

    print("KERNEL_OK")
</pallas_src>

<mosaic_0001>
module attributes {stable_mosaic.version = 11 : i64} {
  func.func @_stack_kernel(%arg0: i32, %arg1: i32, %arg2: memref<4xi32, #tpu.memory_space<smem>>, %arg3: memref<4x16x128xf32, #tpu.memory_space<vmem>>, %arg4: memref<1x128x384xbf16, #tpu.memory_space<vmem>>, %arg5: memref<1x128x128xbf16, #tpu.memory_space<vmem>>, %arg6: memref<1x128x256xbf16, #tpu.memory_space<vmem>>, %arg7: memref<1x256x128xbf16, #tpu.memory_space<vmem>>, %arg8: memref<1x9x128xf32, #tpu.memory_space<vmem>>, %arg9: memref<1x1x256xf32, #tpu.memory_space<vmem>>, %arg10: memref<2x128xf32, #tpu.memory_space<vmem>>, %arg11: memref<4x16x128xf32, #tpu.memory_space<vmem>>, %arg12: memref<64x128xf32, #tpu.memory_space<vmem>>) attributes {dimension_semantics = [#tpu.dimension_semantics<parallel>, #tpu.dimension_semantics<arbitrary>], iteration_bounds = array<i64: 1, 3>, scalar_prefetch = 1 : i64, scratch_operands = 1 : i64, tpu.core_type = #tpu.core_type<tc>, window_params = [{transform_indices = @transform_0, window_bounds = array<i64: 4, 16, 128>}, {transform_indices = @transform_1, window_bounds = array<i64: 1, 128, 384>}, {transform_indices = @transform_2, window_bounds = array<i64: 1, 128, 128>}, {transform_indices = @transform_3, window_bounds = array<i64: 1, 128, 256>}, {transform_indices = @transform_4, window_bounds = array<i64: 1, 256, 128>}, {transform_indices = @transform_5, window_bounds = array<i64: 1, 9, 128>}, {transform_indices = @transform_6, window_bounds = array<i64: 1, 1, 256>}, {pipeline_mode = #tpu.pipeline_mode<synchronous>, transform_indices = @transform_7, window_bounds = array<i64: 2, 128>}, {transform_indices = @transform_8, window_bounds = array<i64: 4, 16, 128>}]} {
    %c0_i32 = arith.constant 0 : i32
    %0 = arith.cmpi eq, %arg1, %c0_i32 : i32
    %1 = arith.extui %0 : i1 to i32
    %c0_i32_0 = arith.constant 0 : i32
    %2 = arith.cmpi ne, %1, %c0_i32_0 : i32
    scf.if %2 {
      %c0_45 = arith.constant 0 : index
      %c0_46 = arith.constant 0 : index
      %c0_47 = arith.constant 0 : index
      %160 = vector.load %arg3[%c0_45, %c0_46, %c0_47] : memref<4x16x128xf32, #tpu.memory_space<vmem>>, vector<4x16x128xf32>
      %161 = vector.shape_cast %160 : vector<4x16x128xf32> to vector<64x128xf32>
      %c0_48 = arith.constant 0 : index
      %c0_49 = arith.constant 0 : index
      %162 = vector.load %arg12[%c0_48, %c0_49] : memref<64x128xf32, #tpu.memory_space<vmem>>, vector<64x128xf32>
      tpu.vector_store %arg12[%c0_48, %c0_49], %161 {strides = array<i32>} : memref<64x128xf32, #tpu.memory_space<vmem>>, vector<64x128xf32>,
    } else {
    }
    %c0 = arith.constant 0 : index
    %c0_1 = arith.constant 0 : index
    %3 = vector.load %arg12[%c0, %c0_1] : memref<64x128xf32, #tpu.memory_space<vmem>>, vector<64x128xf32>
    %c0_2 = arith.constant 0 : index
    %c0_3 = arith.constant 0 : index
    %c0_4 = arith.constant 0 : index
    %4 = vector.load %arg8[%c0_2, %c0_3, %c0_4] : memref<1x9x128xf32, #tpu.memory_space<vmem>>, vector<1x9x128xf32>
    %5 = vector.shape_cast %4 : vector<1x9x128xf32> to vector<9x128xf32>
    %6 = vector.extract_strided_slice %5 {offsets = [0, 0], sizes = [1, 128], strides = [1, 1]} : vector<9x128xf32> to vector<1x128xf32>
    %7 = vector.extract_strided_slice %5 {offsets = [1, 0], sizes = [1, 128], strides = [1, 1]} : vector<9x128xf32> to vector<1x128xf32>
    %8 = vector.extract_strided_slice %5 {offsets = [2, 0], sizes = [1, 128], strides = [1, 1]} : vector<9x128xf32> to vector<1x128xf32>
    %9 = vector.extract_strided_slice %5 {offsets = [3, 0], sizes = [1, 128], strides = [1, 1]} : vector<9x128xf32> to vector<1x128xf32>
    %10 = vector.extract_strided_slice %5 {offsets = [4, 0], sizes = [1, 128], strides = [1, 1]} : vector<9x128xf32> to vector<1x128xf32>
    %11 = vector.extract_strided_slice %5 {offsets = [5, 0], sizes = [1, 128], strides = [1, 1]} : vector<9x128xf32> to vector<1x128xf32>
    %12 = vector.extract_strided_slice %5 {offsets = [6, 0], sizes = [1, 128], strides = [1, 1]} : vector<9x128xf32> to vector<1x128xf32>
    %13 = vector.extract_strided_slice %5 {offsets = [7, 0], sizes = [1, 128], strides = [1, 1]} : vector<9x128xf32> to vector<1x128xf32>
    %14 = vector.extract_strided_slice %5 {offsets = [8, 0], sizes = [1, 128], strides = [1, 1]} : vector<9x128xf32> to vector<1x128xf32>
    %c4_i32 = arith.constant 4 : i32
    %15 = arith.muli %arg0, %c4_i32 : i32
    %16 = tpu.iota {dimensions = array<i32: 1>} : vector<16x16xi32>
    %17 = tpu.iota {dimensions = array<i32: 0>} : vector<16x16xi32>
    %c0_i32_5 = arith.constant 0 : i32
    %18 = arith.addi %15, %c0_i32_5 : i32
    %19 = arith.index_cast %18 : i32 to index
    %20 = memref.load %arg2[%19] : memref<4xi32, #tpu.memory_space<smem>>
    %21 = vector.broadcast %20 : i32 to vector<16x16xi32>
    %22 = arith.cmpi slt, %16, %21 : vector<16x16xi32>
    %23 = arith.cmpi sle, %16, %17 : vector<16x16xi32>
    %24 = arith.andi %22, %23 : vector<16x16xi1>
    %c1_i32 = arith.constant 1 : i32
    %25 = arith.addi %15, %c1_i32 : i32
    %26 = arith.index_cast %25 : i32 to index
    %27 = memref.load %arg2[%26] : memref<4xi32, #tpu.memory_space<smem>>
    %28 = vector.broadcast %27 : i32 to vector<16x16xi32>
    %29 = arith.cmpi slt, %16, %28 : vector<16x16xi32>
    %30 = arith.cmpi sle, %16, %17 : vector<16x16xi32>
    %31 = arith.andi %29, %30 : vector<16x16xi1>
    %c2_i32 = arith.constant 2 : i32
    %32 = arith.addi %15, %c2_i32 : i32
    %33 = arith.index_cast %32 : i32 to index
    %34 = memref.load %arg2[%33] : memref<4xi32, #tpu.memory_space<smem>>
    %35 = vector.broadcast %34 : i32 to vector<16x16xi32>
    %36 = arith.cmpi slt, %16, %35 : vector<16x16xi32>
    %37 = arith.cmpi sle, %16, %17 : vector<16x16xi32>
    %38 = arith.andi %36, %37 : vector<16x16xi1>
    %c3_i32 = arith.constant 3 : i32
    %39 = arith.addi %15, %c3_i32 : i32
    %40 = arith.index_cast %39 : i32 to index
    %41 = memref.load %arg2[%40] : memref<4xi32, #tpu.memory_space<smem>>
    %42 = vector.broadcast %41 : i32 to vector<16x16xi32>
    %43 = arith.cmpi slt, %16, %42 : vector<16x16xi32>
    %44 = arith.cmpi sle, %16, %17 : vector<16x16xi32>
    %45 = arith.andi %43, %44 : vector<16x16xi1>
    %46 = vector.shape_cast %24 : vector<16x16xi1> to vector<1x16x16xi1>
    %47 = vector.shape_cast %31 : vector<16x16xi1> to vector<1x16x16xi1>
    %48 = vector.shape_cast %38 : vector<16x16xi1> to vector<1x16x16xi1>
    %49 = vector.shape_cast %45 : vector<16x16xi1> to vector<1x16x16xi1>
    %50 = tpu.concatenate %46, %47, %48, %49 in 0 : vector<1x16x16xi1>, vector<1x16x16xi1>, vector<1x16x16xi1>, vector<1x16x16xi1> -> vector<4x16x16xi1>
    %cst = arith.constant dense<0.000000e+00> : vector<64xf32>
    %51 = vector.multi_reduction <add>, %3, %cst [1] : vector<64x128xf32> to vector<64xf32>
    %52 = vector.shape_cast %51 : vector<64xf32> to vector<64x1xf32>
    %cst_6 = arith.constant 1.280000e+02 : f32
    %53 = vector.broadcast %cst_6 : f32 to vector<64x1xf32>
    %54 = arith.divf %52, %53 : vector<64x1xf32>
    %55 = vector.broadcast %54 : vector<64x1xf32> to vector<64x128xf32>
    %56 = arith.subf %3, %55 : vector<64x128xf32>
    %57 = arith.mulf %56, %56 : vector<64x128xf32>
    %cst_7 = arith.constant dense<0.000000e+00> : vector<64xf32>
    %58 = vector.multi_reduction <add>, %57, %cst_7 [1] : vector<64x128xf32> to vector<64xf32>
    %59 = vector.shape_cast %58 : vector<64xf32> to vector<64x1xf32>
    %cst_8 = arith.constant 1.280000e+02 : f32
    %60 = vector.broadcast %cst_8 : f32 to vector<64x1xf32>
    %61 = arith.divf %59, %60 : vector<64x1xf32>
    %62 = vector.broadcast %54 : vector<64x1xf32> to vector<64x128xf32>
    %63 = arith.subf %3, %62 : vector<64x128xf32>
    %cst_9 = arith.constant 9.99999974E-6 : f32
    %64 = vector.broadcast %cst_9 : f32 to vector<64x1xf32>
    %65 = arith.addf %61, %64 : vector<64x1xf32>
    %66 = math.rsqrt %65 : vector<64x1xf32>
    %67 = vector.broadcast %66 : vector<64x1xf32> to vector<64x128xf32>
    %68 = arith.mulf %63, %67 : vector<64x128xf32>
    %69 = vector.broadcast %6 : vector<1x128xf32> to vector<64x128xf32>
    %70 = arith.mulf %68, %69 : vector<64x128xf32>
    %71 = vector.broadcast %7 : vector<1x128xf32> to vector<64x128xf32>
    %72 = arith.addf %70, %71 : vector<64x128xf32>
    %73 = arith.truncf %72 : vector<64x128xf32> to vector<64x128xbf16>
    %c0_10 = arith.constant 0 : index
    %c0_11 = arith.constant 0 : index
    %c0_12 = arith.constant 0 : index
    %74 = vector.load %arg4[%c0_10, %c0_11, %c0_12] : memref<1x128x384xbf16, #tpu.memory_space<vmem>>, vector<1x128x384xbf16>
    %75 = vector.shape_cast %74 : vector<1x128x384xbf16> to vector<128x384xbf16>
    %cst_13 = arith.constant dense<0.000000e+00> : vector<64x384xf32>
    %76 = tpu.matmul %73, %75, %cst_13 {dimension_numbers = #tpu.dot_dimension_numbers<[1], [0], [0], [1], [0, 0, 1, 1], [], []>} : vector<64x128xbf16>, vector<128x384xbf16>, vector<64x384xf32> -> vector<64x384xf32>
    %77 = vector.extract_strided_slice %76 {offsets = [0, 0], sizes = [64, 128], strides = [1, 1]} : vector<64x384xf32> to vector<64x128xf32>
    %78 = vector.broadcast %10 : vector<1x128xf32> to vector<64x128xf32>
    %79 = arith.addf %77, %78 : vector<64x128xf32>
    %cst_14 = arith.constant 0.0883883461 : f32
    %80 = vector.broadcast %cst_14 : f32 to vector<64x128xf32>
    %81 = arith.mulf %79, %80 : vector<64x128xf32>
    %82 = vector.extract_strided_slice %76 {offsets = [0, 128], sizes = [64, 128], strides = [1, 1]} : vector<64x384xf32> to vector<64x128xf32>
    %83 = vector.broadcast %11 : vector<1x128xf32> to vector<64x128xf32>
    %84 = arith.addf %82, %83 : vector<64x128xf32>
    %85 = vector.extract_strided_slice %76 {offsets = [0, 256], sizes = [64, 128], strides = [1, 1]} : vector<64x384xf32> to vector<64x128xf32>
    %86 = vector.broadcast %12 : vector<1x128xf32> to vector<64x128xf32>
    %87 = arith.addf %85, %86 : vector<64x128xf32>
    %88 = arith.truncf %81 : vector<64x128xf32> to vector<64x128xbf16>
    %89 = vector.shape_cast %88 : vector<64x128xbf16> to vector<4x16x128xbf16>
    %90 = arith.truncf %84 : vector<64x128xf32> to vector<64x128xbf16>
    %91 = vector.shape_cast %90 : vector<64x128xbf16> to vector<4x16x128xbf16>
    %92 = arith.truncf %87 : vector<64x128xf32> to vector<64x128xbf16>
    %93 = vector.shape_cast %92 : vector<64x128xbf16> to vector<4x16x128xbf16>
    "tpu.trace_start"() <{level = 10 : i32, message = "bqd,bkd->bqk"}> : () -> ()
    %cst_15 = arith.constant dense<0.000000e+00> : vector<4x16x16xf32>
    %94 = tpu.matmul %89, %91, %cst_15 {dimension_numbers = #tpu.dot_dimension_numbers<[2], [2], [1], [1], [0, 0, 0, 1, 1, 1], [0], [0]>} : vector<4x16x128xbf16>, vector<4x16x128xbf16>, vector<4x16x16xf32> -> vector<4x16x16xf32>
    %cst_16 = arith.constant -1.000000e+30 : f32
    "tpu.trace_stop"() : () -> ()
    %95 = vector.broadcast %cst_16 : f32 to vector<4x16x16xf32>
    %96 = arith.select %50, %94, %95 : vector<4x16x16xi1>, vector<4x16x16xf32>
    %cst_17 = arith.constant dense<0xFF800000> : vector<4x16xf32>
    %97 = vector.multi_reduction <maximumf>, %96, %cst_17 [2] : vector<4x16x16xf32> to vector<4x16xf32>
    %98 = vector.shape_cast %97 : vector<4x16xf32> to vector<4x16x1xf32>
    %99 = vector.broadcast %98 : vector<4x16x1xf32> to vector<4x16x16xf32>
    %100 = arith.subf %96, %99 : vector<4x16x16xf32>
    %101 = math.exp %100 : vector<4x16x16xf32>
    %cst_18 = arith.constant dense<0.000000e+00> : vector<4x16xf32>
    %102 = vector.multi_reduction <add>, %101, %cst_18 [2] : vector<4x16x16xf32> to vector<4x16xf32>
    %103 = vector.shape_cast %102 : vector<4x16xf32> to vector<4x16x1xf32>
    %104 = arith.truncf %101 : vector<4x16x16xf32> to vector<4x16x16xbf16>
    "tpu.trace_start"() <{level = 10 : i32, message = "bqk,bkd->bqd"}> : () -> ()
    %cst_19 = arith.constant dense<0.000000e+00> : vector<4x16x128xf32>
    %105 = tpu.matmul %104, %93, %cst_19 {dimension_numbers = #tpu.dot_dimension_numbers<[2], [1], [1], [2], [0, 0, 0, 1, 1, 2], [0], [0]>} : vector<4x16x16xbf16>, vector<4x16x128xbf16>, vector<4x16x128xf32> -> vector<4x16x128xf32>
    "tpu.trace_stop"() : () -> ()
    %106 = tpu.reciprocal %103 {approx = true} : vector<4x16x1xf32> -> vector<4x16x1xf32>
    %107 = vector.broadcast %106 : vector<4x16x1xf32> to vector<4x16x128xf32>
    %108 = arith.mulf %105, %107 : vector<4x16x128xf32>
    %109 = vector.shape_cast %108 : vector<4x16x128xf32> to vector<64x128xf32>
    %110 = arith.truncf %109 : vector<64x128xf32> to vector<64x128xbf16>
    %c0_20 = arith.constant 0 : index
    %c0_21 = arith.constant 0 : index
    %c0_22 = arith.constant 0 : index
    %111 = vector.load %arg5[%c0_20, %c0_21, %c0_22] : memref<1x128x128xbf16, #tpu.memory_space<vmem>>, vector<1x128x128xbf16>
    %112 = vector.shape_cast %111 : vector<1x128x128xbf16> to vector<128x128xbf16>
    %cst_23 = arith.constant dense<0.000000e+00> : vector<64x128xf32>
    %113 = tpu.matmul %110, %112, %cst_23 {dimension_numbers = #tpu.dot_dimension_numbers<[1], [0], [0], [1], [0, 0, 1, 1], [], []>} : vector<64x128xbf16>, vector<128x128xbf16>, vector<64x128xf32> -> vector<64x128xf32>
    %114 = arith.addf %3, %113 : vector<64x128xf32>
    %115 = vector.broadcast %13 : vector<1x128xf32> to vector<64x128xf32>
    %116 = arith.addf %114, %115 : vector<64x128xf32>
    %cst_24 = arith.constant dense<0.000000e+00> : vector<64xf32>
    %117 = vector.multi_reduction <add>, %116, %cst_24 [1] : vector<64x128xf32> to vector<64xf32>
    %118 = vector.shape_cast %117 : vector<64xf32> to vector<64x1xf32>
    %cst_25 = arith.constant 1.280000e+02 : f32
    %119 = vector.broadcast %cst_25 : f32 to vector<64x1xf32>
    %120 = arith.divf %118, %119 : vector<64x1xf32>
    %121 = vector.broadcast %120 : vector<64x1xf32> to vector<64x128xf32>
    %122 = arith.subf %116, %121 : vector<64x128xf32>
    %123 = arith.mulf %122, %122 : vector<64x128xf32>
    %cst_26 = arith.constant dense<0.000000e+00> : vector<64xf32>
    %124 = vector.multi_reduction <add>, %123, %cst_26 [1] : vector<64x128xf32> to vector<64xf32>
    %125 = vector.shape_cast %124 : vector<64xf32> to vector<64x1xf32>
    %cst_27 = arith.constant 1.280000e+02 : f32
    %126 = vector.broadcast %cst_27 : f32 to vector<64x1xf32>
    %127 = arith.divf %125, %126 : vector<64x1xf32>
    %128 = vector.broadcast %120 : vector<64x1xf32> to vector<64x128xf32>
    %129 = arith.subf %116, %128 : vector<64x128xf32>
    %cst_28 = arith.constant 9.99999974E-6 : f32
    %130 = vector.broadcast %cst_28 : f32 to vector<64x1xf32>
    %131 = arith.addf %127, %130 : vector<64x1xf32>
    %132 = math.rsqrt %131 : vector<64x1xf32>
    %133 = vector.broadcast %132 : vector<64x1xf32> to vector<64x128xf32>
    %134 = arith.mulf %129, %133 : vector<64x128xf32>
    %135 = vector.broadcast %8 : vector<1x128xf32> to vector<64x128xf32>
    %136 = arith.mulf %134, %135 : vector<64x128xf32>
    %137 = vector.broadcast %9 : vector<1x128xf32> to vector<64x128xf32>
    %138 = arith.addf %136, %137 : vector<64x128xf32>
    %139 = arith.truncf %138 : vector<64x128xf32> to vector<64x128xbf16>
    %c0_29 = arith.constant 0 : index
    %c0_30 = arith.constant 0 : index
    %c0_31 = arith.constant 0 : index
    %140 = vector.load %arg6[%c0_29, %c0_30, %c0_31] : memref<1x128x256xbf16, #tpu.memory_space<vmem>>, vector<1x128x256xbf16>
    %141 = vector.shape_cast %140 : vector<1x128x256xbf16> to vector<128x256xbf16>
    %cst_32 = arith.constant dense<0.000000e+00> : vector<64x256xf32>
    %142 = tpu.matmul %139, %141, %cst_32 {dimension_numbers = #tpu.dot_dimension_numbers<[1], [0], [0], [1], [0, 0, 1, 1], [], []>} : vector<64x128xbf16>, vector<128x256xbf16>, vector<64x256xf32> -> vector<64x256xf32>
    %c0_33 = arith.constant 0 : index
    %c0_34 = arith.constant 0 : index
    %c0_35 = arith.constant 0 : index
    %143 = vector.load %arg9[%c0_33, %c0_34, %c0_35] : memref<1x1x256xf32, #tpu.memory_space<vmem>>, vector<1x1x256xf32>
    %144 = vector.shape_cast %143 : vector<1x1x256xf32> to vector<1x256xf32>
    %145 = vector.broadcast %144 : vector<1x256xf32> to vector<64x256xf32>
    %146 = arith.addf %142, %145 : vector<64x256xf32>
    %cst_36 = arith.constant 0.000000e+00 : f32
    %147 = vector.broadcast %cst_36 : f32 to vector<64x256xf32>
    %148 = arith.maximumf %146, %147 : vector<64x256xf32>
    %149 = arith.truncf %148 : vector<64x256xf32> to vector<64x256xbf16>
    %c0_37 = arith.constant 0 : index
    %c0_38 = arith.constant 0 : index
    %c0_39 = arith.constant 0 : index
    %150 = vector.load %arg7[%c0_37, %c0_38, %c0_39] : memref<1x256x128xbf16, #tpu.memory_space<vmem>>, vector<1x256x128xbf16>
    %151 = vector.shape_cast %150 : vector<1x256x128xbf16> to vector<256x128xbf16>
    %cst_40 = arith.constant dense<0.000000e+00> : vector<64x128xf32>
    %152 = tpu.matmul %149, %151, %cst_40 {dimension_numbers = #tpu.dot_dimension_numbers<[1], [0], [0], [1], [0, 0, 1, 1], [], []>} : vector<64x256xbf16>, vector<256x128xbf16>, vector<64x128xf32> -> vector<64x128xf32>
    %153 = arith.addf %116, %152 : vector<64x128xf32>
    %154 = vector.broadcast %14 : vector<1x128xf32> to vector<64x128xf32>
    %155 = arith.addf %153, %154 : vector<64x128xf32>
    %c0_41 = arith.constant 0 : index
    %c0_42 = arith.constant 0 : index
    %156 = vector.load %arg12[%c0_41, %c0_42] : memref<64x128xf32, #tpu.memory_space<vmem>>, vector<64x128xf32>
    tpu.vector_store %arg12[%c0_41, %c0_42], %155 {strides = array<i32>} : memref<64x128xf32, #tpu.memory_space<vmem>>, vector<64x128xf32>,
    %c2_i32_43 = arith.constant 2 : i32
    %157 = arith.cmpi eq, %arg1, %c2_i32_43 : i32
    %158 = arith.extui %157 : i1 to i32
    %c0_i32_44 = arith.constant 0 : i32
    %159 = arith.cmpi ne, %158, %c0_i32_44 : i32
    scf.if %159 {
      %c0_45 = arith.constant 0 : index
      %c0_46 = arith.constant 0 : index
      %160 = vector.load %arg10[%c0_45, %c0_46] : memref<2x128xf32, #tpu.memory_space<vmem>>, vector<1x128xf32>
      %c1 = arith.constant 1 : index
      %c0_47 = arith.constant 0 : index
      %161 = vector.load %arg10[%c1, %c0_47] : memref<2x128xf32, #tpu.memory_space<vmem>>, vector<1x128xf32>
      %cst_48 = arith.constant dense<0.000000e+00> : vector<64xf32>
      %162 = vector.multi_reduction <add>, %155, %cst_48 [1] : vector<64x128xf32> to vector<64xf32>
      %163 = vector.shape_cast %162 : vector<64xf32> to vector<64x1xf32>
      %cst_49 = arith.constant 1.280000e+02 : f32
      %164 = vector.broadcast %cst_49 : f32 to vector<64x1xf32>
      %165 = arith.divf %163, %164 : vector<64x1xf32>
      %166 = vector.broadcast %165 : vector<64x1xf32> to vector<64x128xf32>
      %167 = arith.subf %155, %166 : vector<64x128xf32>
      %168 = arith.mulf %167, %167 : vector<64x128xf32>
      %cst_50 = arith.constant dense<0.000000e+00> : vector<64xf32>
      %169 = vector.multi_reduction <add>, %168, %cst_50 [1] : vector<64x128xf32> to vector<64xf32>
      %170 = vector.shape_cast %169 : vector<64xf32> to vector<64x1xf32>
      %cst_51 = arith.constant 1.280000e+02 : f32
      %171 = vector.broadcast %cst_51 : f32 to vector<64x1xf32>
      %172 = arith.divf %170, %171 : vector<64x1xf32>
      %173 = vector.broadcast %165 : vector<64x1xf32> to vector<64x128xf32>
      %174 = arith.subf %155, %173 : vector<64x128xf32>
      %cst_52 = arith.constant 9.99999974E-6 : f32
      %175 = vector.broadcast %cst_52 : f32 to vector<64x1xf32>
      %176 = arith.addf %172, %175 : vector<64x1xf32>
      %177 = math.rsqrt %176 : vector<64x1xf32>
      %178 = vector.broadcast %177 : vector<64x1xf32> to vector<64x128xf32>
      %179 = arith.mulf %174, %178 : vector<64x128xf32>
      %180 = vector.broadcast %160 : vector<1x128xf32> to vector<64x128xf32>
      %181 = arith.mulf %179, %180 : vector<64x128xf32>
      %182 = vector.broadcast %161 : vector<1x128xf32> to vector<64x128xf32>
      %183 = arith.addf %181, %182 : vector<64x128xf32>
      %184 = vector.shape_cast %183 : vector<64x128xf32> to vector<4x16x128xf32>
      %c0_53 = arith.constant 0 : index
      %c0_54 = arith.constant 0 : index
      %c0_55 = arith.constant 0 : index
      %185 = vector.load %arg11[%c0_53, %c0_54, %c0_55] : memref<4x16x128xf32, #tpu.memory_space<vmem>>, vector<4x16x128xf32>
      tpu.vector_store %arg11[%c0_53, %c0_54, %c0_55], %184 {strides = array<i32>} : memref<4x16x128xf32, #tpu.memory_space<vmem>>, vector<4x16x128xf32>,
    } else {
    }
    return
  }
  func.func @transform_0(%arg0: i32, %arg1: i32, %arg2: memref<4xi32, #tpu.memory_space<smem>>) -> (i32, i32, i32) {
    %c0_i32 = arith.constant 0 : i32
    %c0_i32_0 = arith.constant 0 : i32
    %c0_i32_1 = arith.constant 0 : i32
    return %arg0, %c0_i32, %c0_i32_0 : i32, i32, i32
  }
  func.func @transform_1(%arg0: i32, %arg1: i32, %arg2: memref<4xi32, #tpu.memory_space<smem>>) -> (i32, i32, i32) {
    %c0_i32 = arith.constant 0 : i32
    %c0_i32_0 = arith.constant 0 : i32
    %c0_i32_1 = arith.constant 0 : i32
    return %arg1, %c0_i32, %c0_i32_0 : i32, i32, i32
  }
  func.func @transform_2(%arg0: i32, %arg1: i32, %arg2: memref<4xi32, #tpu.memory_space<smem>>) -> (i32, i32, i32) {
    %c0_i32 = arith.constant 0 : i32
    %c0_i32_0 = arith.constant 0 : i32
    %c0_i32_1 = arith.constant 0 : i32
    return %arg1, %c0_i32, %c0_i32_0 : i32, i32, i32
  }
  func.func @transform_3(%arg0: i32, %arg1: i32, %arg2: memref<4xi32, #tpu.memory_space<smem>>) -> (i32, i32, i32) {
    %c0_i32 = arith.constant 0 : i32
    %c0_i32_0 = arith.constant 0 : i32
    %c0_i32_1 = arith.constant 0 : i32
    return %arg1, %c0_i32, %c0_i32_0 : i32, i32, i32
  }
  func.func @transform_4(%arg0: i32, %arg1: i32, %arg2: memref<4xi32, #tpu.memory_space<smem>>) -> (i32, i32, i32) {
    %c0_i32 = arith.constant 0 : i32
    %c0_i32_0 = arith.constant 0 : i32
    %c0_i32_1 = arith.constant 0 : i32
    return %arg1, %c0_i32, %c0_i32_0 : i32, i32, i32
  }
  func.func @transform_5(%arg0: i32, %arg1: i32, %arg2: memref<4xi32, #tpu.memory_space<smem>>) -> (i32, i32, i32) {
    %c0_i32 = arith.constant 0 : i32
    %c0_i32_0 = arith.constant 0 : i32
    %c0_i32_1 = arith.constant 0 : i32
    return %arg1, %c0_i32, %c0_i32_0 : i32, i32, i32
  }
  func.func @transform_6(%arg0: i32, %arg1: i32, %arg2: memref<4xi32, #tpu.memory_space<smem>>) -> (i32, i32, i32) {
    %c0_i32 = arith.constant 0 : i32
    %c0_i32_0 = arith.constant 0 : i32
    %c0_i32_1 = arith.constant 0 : i32
    return %arg1, %c0_i32, %c0_i32_0 : i32, i32, i32
  }
  func.func @transform_7(%arg0: i32, %arg1: i32, %arg2: memref<4xi32, #tpu.memory_space<smem>>) -> (i32, i32) {
    %c0_i32 = arith.constant 0 : i32
    %c0_i32_0 = arith.constant 0 : i32
    %c0_i32_1 = arith.constant 0 : i32
    return %c0_i32, %c0_i32_0 : i32, i32
  }
  func.func @transform_8(%arg0: i32, %arg1: i32, %arg2: memref<4xi32, #tpu.memory_space<smem>>) -> (i32, i32, i32) {
    %c0_i32 = arith.constant 0 : i32
    %c0_i32_0 = arith.constant 0 : i32
    %c0_i32_1 = arith.constant 0 : i32
    return %arg0, %c0_i32, %c0_i32_0 : i32, i32, i32
  }
}

</mosaic_0001>

<llo_original>
// kernel: tpu_custom_call.1
$region0: #{tpu_custom_call.1}
  #allocation0 [shape = 'u32[]', space=smem, size = 0x4, offset = 0x4, fixed_abs, tag = 'smem constant byte address 0x4 - core index']
  #allocation1 [shape = 'u32[72,128]{1,0:T(1,128)}', space=vmem, size = 0x9000, scoped, tag = 'internal scratch']
  #allocation2 [shape = 'f32[64,128]{1,0:T(8,128)}', space=vmem, size = 0x8000, scoped, tag = 'scratch operand']
  #allocation3 [shape = 's32[1]{0}', space=sflag, size = 0x4, scoped, tag = 'scoped memory for tpu_custom_call.1']
  #allocation4 [shape = 'u8[512]{0}', space=smem, size = 0x200, scoped, tag = 'prefetched SMEM operand 0']
  %s0 = inlined_call_operand.vmem [shape: s32[4], index: 0, kind: input, shape index: {}]
  %s1 = inlined_call_operand.vmem [shape: f32[4,16,128], index: 1, kind: input, shape index: {}]
  %s2 = inlined_call_operand.hbm [shape: bf16[3,128,384], index: 2, kind: input, shape index: {}]
  %s3 = inlined_call_operand.hbm [shape: bf16[3,128,128], index: 3, kind: input, shape index: {}]
  %s4 = inlined_call_operand.hbm [shape: bf16[3,128,256], index: 4, kind: input, shape index: {}]
  %s5 = inlined_call_operand.hbm [shape: bf16[3,256,128], index: 5, kind: input, shape index: {}]
  %s6 = inlined_call_operand.vmem [shape: f32[3,9,128], index: 6, kind: input, shape index: {}]
  %s7 = inlined_call_operand.vmem [shape: f32[3,1,256], index: 7, kind: input, shape index: {}]
  %s8 = inlined_call_operand.vmem [shape: f32[2,128], index: 8, kind: input, shape index: {}]
  %s9 = inlined_call_operand.hbm [shape: f32[4,16,128], index: 9, kind: output, shape index: {}]
  %s10 = sld [smem:[#allocation0]]
  $region89: #{tpu_custom_call.1} parent=0
    _
  %s12 = ssub.s32 1, %s10
  %s13 = scalar_select 0, %s12, %s10
  %s15 = sshll.u32 %s0, 4
  %s16 = int_to_ptr.vmem [resolvable:$true] %s15
  %18 = dma.vmem_to_smem %s16, 16, [#allocation4], [#allocation3]
  %20 = dma.done [#allocation3], 16
  %21 = sfence
  $region1: #{tpu_custom_call.1} parent=0
    #allocation5 [shape = 'u8[196608]{0}', space=vmem, size = 0x30000, scoped, tag = 'input window, operand 2']
    #allocation6 [shape = 's32[2]{0}', space=sflag, size = 0x8, scoped, tag = 'scoped memory for tpu_custom_call.1']
    #allocation7 [shape = 's32[2]{0}', space=sflag, size = 0x8, scoped, tag = 'scoped memory for tpu_custom_call.1']
    #allocation8 [shape = 'u8[65536]{0}', space=vmem, size = 0x10000, scoped, tag = 'input window, operand 3']
    #allocation9 [shape = 's32[2]{0}', space=sflag, size = 0x8, scoped, tag = 'scoped memory for tpu_custom_call.1']
    #allocation10 [shape = 'u8[131072]{0}', space=vmem, size = 0x20000, scoped, tag = 'input window, operand 4']
    #allocation11 [shape = 'u8[131072]{0}', space=vmem, size = 0x20000, scoped, tag = 'input window, operand 5']
    #allocation12 [shape = 's32[2]{0}', space=sflag, size = 0x8, scoped, tag = 'scoped memory for tpu_custom_call.1']
    #allocation13 [shape = 'u8[32768]{0}', space=vmem, size = 0x8000, scoped, tag = 'output window, operand 0, single buffered']
    %22 = vsyncpa [#allocation6], 0
    %s23 = scalar_lea.sflag [#allocation6], 1
    %24 = vsyncpa %s23, 0
    %25 = vsyncpa [#allocation9], 0
    %s26 = scalar_lea.sflag [#allocation9], 1
    %27 = vsyncpa %s26, 0
    %28 = vsyncpa [#allocation12], 0
    %s29 = scalar_lea.sflag [#allocation12], 1
    %30 = vsyncpa %s29, 0
    %31 = vsyncpa [#allocation7], 0
    loop: start=0, step=1, limit=5
    $region2: #{tpu_custom_call.1} parent=1 // loop_pre_header
      _
    $region3: #{tpu_custom_call.1} parent=1 // loop_header
      %s33 = sphi 0, %s37
      %p34 = scmp.ge.s32.totalorder %s33, 5
      %s40 = sphi 0, %s52
      %s41 = sphi 0, %s48
      %s42 = sphi 0, %s40
      %s43 = sphi 0, %s41
      %s44 = sphi 0, %s42
      %s45 = sphi 0, %s43
      %s55 = sphi 0, %s57
      %s58 = sphi 0, %s55
      %s59 = sphi 0, %s58
      %s75 = sphi 0, %s59
      %s81 = sphi 0, %s83
      %s84 = sphi 0, %s81
      %s85 = sphi 0, %s84
      %s101 = sphi 0, %s85
      %s107 = sphi 0, %s109
      %s110 = sphi 0, %s107
      %s111 = sphi 0, %s110
      %s127 = sphi 0, %s111
      %s133 = sphi 0, %s135
      %s136 = sphi 0, %s133
      %s137 = sphi 0, %s136
      %s153 = sphi 0, %s137
      %s159 = sphi 0, %s161
      %s162 = sphi 0, %s159
      %s163 = sphi 0, %s162
      %s179 = sphi 0, %s163
      %s185 = sphi 0, %s187
      %s188 = sphi 0, %s185
      %s189 = sphi 0, %s188
      %s205 = sphi 0, %s189
      %s211 = sphi 0, %s213
      %s214 = sphi 0, %s211
      %s215 = sphi 0, %s214
      %s231 = sphi 0, %s215
      %s235 = sphi 0, %s235
      %s237 = sphi 0, %s235
      %s238 = sphi 0, %s237
      %s252 = sphi 0, %s238
      %s258 = sphi 0, %s260
      %s261 = sphi 0, %s258
      %s262 = sphi 0, %s261
      %s278 = sphi 0, %s262
    $region4: #{tpu_custom_call.1} parent=1 // loop_header_branch
      %36 = sbr.rel (%p34) target = $region8
    $region5: #{tpu_custom_call.1} parent=1 // loop_body
      %s38 = ssub.s32 %s33, 1
      %s39 = ssub.s32 %s33, 2
      %s46 = sadd.s32 1, %s41
      %p47 = scmp.ge.s32.totalorder %s46, 3
      %s48 = scalar_select %p47, 0, %s46
      %s49 = sadd.s32 1, %s40
      %s50 = scalar_select %p47, %s49, %s40
      %p51 = scmp.ge.s32.totalorder %s50, 1
      %s52 = scalar_select %p51, 0, %s50
      %s53 = ssub.s32 %s40, %s52
      %p54 = scmp.eq.s32.totalorder %s53, 0
      %s56 = sadd.s32 %s55, 1
      %s57 = scalar_select %p54, %s55, %s56
      %p60 = pneg %p54
      %p61 = scmp.eq.s32.totalorder %s33, 2
      %p62 = por %p60, %p61
      %p63 = scmp.ne.s32.totalorder %s55, %s58
      %p64 = scmp.eq.s32.totalorder %s33, 0
      %p65 = por %p63, %p64
      %p66 = scmp.ne.s32.totalorder %s55, %s58
      %p67 = scmp.eq.s32.totalorder %s38, 2
      %p68 = por %p66, %p67
      %p69 = scmp.ne.s32.totalorder %s58, %s59
      %p70 = scmp.eq.s32.totalorder %s38, 0
      %p71 = por %p69, %p70
      %p72 = scmp.ne.s32.totalorder %s58, %s59
      %p73 = scmp.eq.s32.totalorder %s39, 2
      %p74 = por %p72, %p73
      %p76 = scmp.ne.s32.totalorder %s59, %s75
      %p77 = scmp.eq.s32.totalorder %s39, 0
      %p78 = por %p76, %p77
      %s79 = ssub.s32 %s41, %s48
      %p80 = scmp.eq.s32.totalorder %s79, 0
      %s82 = sadd.s32 %s81, 1
      %s83 = scalar_select %p80, %s81, %s82
      %p86 = pneg %p80
      %p87 = scmp.eq.s32.totalorder %s33, 2
      %p88 = por %p86, %p87
      %p89 = scmp.ne.s32.totalorder %s81, %s84
      %p90 = scmp.eq.s32.totalorder %s33, 0
      %p91 = por %p89, %p90
      %p92 = scmp.ne.s32.totalorder %s81, %s84
      %p93 = scmp.eq.s32.totalorder %s38, 2
      %p94 = por %p92, %p93
      %p95 = scmp.ne.s32.totalorder %s84, %s85
      %p96 = scmp.eq.s32.totalorder %s38, 0
      %p97 = por %p95, %p96
      %p98 = scmp.ne.s32.totalorder %s84, %s85
      %p99 = scmp.eq.s32.totalorder %s39, 2
      %p100 = por %p98, %p99
      %p102 = scmp.ne.s32.totalorder %s85, %s101
      %p103 = scmp.eq.s32.totalorder %s39, 0
      %p104 = por %p102, %p103
      %s105 = ssub.s32 %s41, %s48
      %p106 = scmp.eq.s32.totalorder %s105, 0
      %s108 = sadd.s32 %s107, 1
      %s109 = scalar_select %p106, %s107, %s108
      %p112 = pneg %p106
      %p113 = scmp.eq.s32.totalorder %s33, 2
      %p114 = por %p112, %p113
      %p115 = scmp.ne.s32.totalorder %s107, %s110
      %p116 = scmp.eq.s32.totalorder %s33, 0
      %p117 = por %p115, %p116
      %p118 = scmp.ne.s32.totalorder %s107, %s110
      %p119 = scmp.eq.s32.totalorder %s38, 2
      %p120 = por %p118, %p119
      %p121 = scmp.ne.s32.totalorder %s110, %s111
      %p122 = scmp.eq.s32.totalorder %s38, 0
      %p123 = por %p121, %p122
      %p124 = scmp.ne.s32.totalorder %s110, %s111
      %p125 = scmp.eq.s32.totalorder %s39, 2
      %p126 = por %p124, %p125
      %p128 = scmp.ne.s32.totalorder %s111, %s127
      %p129 = scmp.eq.s32.totalorder %s39, 0
      %p130 = por %p128, %p129
      %s131 = ssub.s32 %s41, %s48
      %p132 = scmp.eq.s32.totalorder %s131, 0
      %s134 = sadd.s32 %s133, 1
      %s135 = scalar_select %p132, %s133, %s134
      %p138 = pneg %p132
      %p139 = scmp.eq.s32.totalorder %s33, 2
      %p140 = por %p138, %p139
      %p141 = scmp.ne.s32.totalorder %s133, %s136
      %p142 = scmp.eq.s32.totalorder %s33, 0
      %p143 = por %p141, %p142
      %p144 = scmp.ne.s32.totalorder %s133, %s136
      %p145 = scmp.eq.s32.totalorder %s38, 2
      %p146 = por %p144, %p145
      %p147 = scmp.ne.s32.totalorder %s136, %s137
      %p148 = scmp.eq.s32.totalorder %s38, 0
      %p149 = por %p147, %p148
      %p150 = scmp.ne.s32.totalorder %s136, %s137
      %p151 = scmp.eq.s32.totalorder %s39, 2
      %p152 = por %p150, %p151
      %p154 = scmp.ne.s32.totalorder %s137, %s153
      %p155 = scmp.eq.s32.totalorder %s39, 0
      %p156 = por %p154, %p155
      %s157 = ssub.s32 %s41, %s48
      %p158 = scmp.eq.s32.totalorder %s157, 0
      %s160 = sadd.s32 %s159, 1
      %s161 = scalar_select %p158, %s159, %s160
      %p164 = pneg %p158
      %p165 = scmp.eq.s32.totalorder %s33, 2
      %p166 = por %p164, %p165
      %p167 = scmp.ne.s32.totalorder %s159, %s162
      %p168 = scmp.eq.s32.totalorder %s33, 0
      %p169 = por %p167, %p168
      %p170 = scmp.ne.s32.totalorder %s159, %s162
      %p171 = scmp.eq.s32.totalorder %s38, 2
      %p172 = por %p170, %p171
      %p173 = scmp.ne.s32.totalorder %s162, %s163
      %p174 = scmp.eq.s32.totalorder %s38, 0
      %p175 = por %p173, %p174
      %p176 = scmp.ne.s32.totalorder %s162, %s163
      %p177 = scmp.eq.s32.totalorder %s39, 2
      %p178 = por %p176, %p177
      %p180 = scmp.ne.s32.totalorder %s163, %s179
      %p181 = scmp.eq.s32.totalorder %s39, 0
      %p182 = por %p180, %p181
      %s183 = ssub.s32 %s41, %s48
      %p184 = scmp.eq.s32.totalorder %s183, 0
      %s186 = sadd.s32 %s185, 1
      %s187 = scalar_select %p184, %s185, %s186
      %p190 = pneg %p184
      %p191 = scmp.eq.s32.totalorder %s33, 2
      %p192 = por %p190, %p191
      %p193 = scmp.ne.s32.totalorder %s185, %s188
      %p194 = scmp.eq.s32.totalorder %s33, 0
      %p195 = por %p193, %p194
      %p196 = scmp.ne.s32.totalorder %s185, %s188
      %p197 = scmp.eq.s32.totalorder %s38, 2
      %p198 = por %p196, %p197
      %p199 = scmp.ne.s32.totalorder %s188, %s189
      %p200 = scmp.eq.s32.totalorder %s38, 0
      %p201 = por %p199, %p200
      %p202 = scmp.ne.s32.totalorder %s188, %s189
      %p203 = scmp.eq.s32.totalorder %s39, 2
      %p204 = por %p202, %p203
      %p206 = scmp.ne.s32.totalorder %s189, %s205
      %p207 = scmp.eq.s32.totalorder %s39, 0
      %p208 = por %p206, %p207
      %s209 = ssub.s32 %s41, %s48
      %p210 = scmp.eq.s32.totalorder %s209, 0
      %s212 = sadd.s32 %s211, 1
      %s213 = scalar_select %p210, %s211, %s212
      %p216 = pneg %p210
      %p217 = scmp.eq.s32.totalorder %s33, 2
      %p218 = por %p216, %p217
      %p219 = scmp.ne.s32.totalorder %s211, %s214
      %p220 = scmp.eq.s32.totalorder %s33, 0
      %p221 = por %p219, %p220
      %p222 = scmp.ne.s32.totalorder %s211, %s214
      %p223 = scmp.eq.s32.totalorder %s38, 2
      %p224 = por %p222, %p223
      %p225 = scmp.ne.s32.totalorder %s214, %s215
      %p226 = scmp.eq.s32.totalorder %s38, 0
      %p227 = por %p225, %p226
      %p228 = scmp.ne.s32.totalorder %s214, %s215
      %p229 = scmp.eq.s32.totalorder %s39, 2
      %p230 = por %p228, %p229
      %p232 = scmp.ne.s32.totalorder %s215, %s231
      %p233 = scmp.eq.s32.totalorder %s39, 0
      %p234 = por %p232, %p233
      %s236 = sadd.s32 %s235, 1
      %p239 = scmp.eq.s32.totalorder %s33, 2
      %p240 = scmp.ne.s32.totalorder %s235, %s237
      %p241 = scmp.eq.s32.totalorder %s33, 0
      %p242 = por %p240, %p241
      %p243 = scmp.ne.s32.totalorder %s235, %s237
      %p244 = scmp.eq.s32.totalorder %s38, 2
      %p245 = por %p243, %p244
      %p246 = scmp.ne.s32.totalorder %s237, %s238
      %p247 = scmp.eq.s32.totalorder %s38, 0
      %p248 = por %p246, %p247
      %p249 = scmp.ne.s32.totalorder %s237, %s238
      %p250 = scmp.eq.s32.totalorder %s39, 2
      %p251 = por %p249, %p250
      %p253 = scmp.ne.s32.totalorder %s238, %s252
      %p254 = scmp.eq.s32.totalorder %s39, 0
      %p255 = por %p253, %p254
      %s256 = ssub.s32 %s40, %s52
      %p257 = scmp.eq.s32.totalorder %s256, 0
      %s259 = sadd.s32 %s258, 1
      %s260 = scalar_select %p257, %s258, %s259
      %p263 = pneg %p257
      %p264 = scmp.eq.s32.totalorder %s33, 2
      %p265 = por %p263, %p264
      %p266 = scmp.ne.s32.totalorder %s258, %s261
      %p267 = scmp.eq.s32.totalorder %s33, 0
      %p268 = por %p266, %p267
      %p269 = scmp.ne.s32.totalorder %s258, %s261
      %p270 = scmp.eq.s32.totalorder %s38, 2
      %p271 = por %p269, %p270
      %p272 = scmp.ne.s32.totalorder %s261, %s262
      %p273 = scmp.eq.s32.totalorder %s38, 0
      %p274 = por %p272, %p273
      %p275 = scmp.ne.s32.totalorder %s261, %s262
      %p276 = scmp.eq.s32.totalorder %s39, 2
      %p277 = por %p275, %p276
      %p279 = scmp.ne.s32.totalorder %s262, %s278
      %p280 = scmp.eq.s32.totalorder %s39, 0
      %p281 = por %p279, %p280
      %p282 = scmp.le.s32.totalorder 1, %s33
      %p283 = scmp.lt.s32.totalorder %s33, 4
      %p284 = pnand %p282, %p283
      %p285 = pneg %p284
      // Predicated region
      $region9: #{tpu_custom_call.1} parent=5 // pred_check
        _
      $region10: #{tpu_custom_call.1} parent=5 // pred_check_branch
        %287 = sbr.rel (%p284) target = $region12
      $region11: #{tpu_custom_call.1} parent=5 // pred_region
        %s288 = ssub.s32 %s33, 1
        // Predicated region
        $region13: #{tpu_custom_call.1} parent=11 // pred_check
          %p289 = pneg %p71
        $region14: #{tpu_custom_call.1} parent=11 // pred_check_branch
          %291 = sbr.rel (%p289) target = $region16
        $region15: #{tpu_custom_call.1} parent=11 // pred_region
          %s292 = smul.u32 4, %s42
          %p293 = scmp.lt.s32.totalorder %s292, 3
          %s294 = scalar_select %p293, %s292, 3
          %s295 = smul.addr %s294, 2
          %s296 = smul.addr %s295, 8
          %s297 = scalar_lea.vmem %s1, %s296
          %s298 = smul.u32 4, %s42
        $region16: #{tpu_custom_call.1} parent=11 // pred_fallthru
          _
        // Predicated region
        $region17: #{tpu_custom_call.1} parent=11 // pred_check
          %p299 = pneg %p248
        $region18: #{tpu_custom_call.1} parent=11 // pred_check_branch
          %301 = sbr.rel (%p299) target = $region20
        $region19: #{tpu_custom_call.1} parent=11 // pred_region
          _
        $region20: #{tpu_custom_call.1} parent=11 // pred_fallthru
          _
      $region12: #{tpu_custom_call.1} parent=5 // pred_fallthru
        _
      %p302 = scmp.lt.s32.totalorder %s33, 3
      // Predicated region
      $region21: #{tpu_custom_call.1} parent=5 // pred_check
        %p303 = pneg %p302
      $region22: #{tpu_custom_call.1} parent=5 // pred_check_branch
        %305 = sbr.rel (%p303) target = $region24
      $region23: #{tpu_custom_call.1} parent=5 // pred_region
        // Predicated region
        $region25: #{tpu_custom_call.1} parent=23 // pred_check
          %p306 = pneg %p91
        $region26: #{tpu_custom_call.1} parent=23 // pred_check_branch
          %308 = sbr.rel (%p306) target = $region28
        $region27: #{tpu_custom_call.1} parent=23 // pred_region
          %s309 = sand.u32 %s81, 1
          %s310 = scalar_lea.sflag [#allocation6], %s309
          %s311 = sand.u32 %s81, 1
          %s312 = smul.addr %s311, 192
          %s313 = scalar_lea.vmem [#allocation5], %s312
          %315 = vsyncadd %s310, 0
          %s316 = smul.addr %s41, 48
          %s317 = smul.addr %s316, 4
          %s318 = scalar_lea.hbm %s2, %s317
          %s319 = sshll.u32 %s318, 4
          %s320 = int_to_ptr.hbm [resolvable:$true] %s319
          %s321 = sshll.u32 %s313, 4
          %s322 = int_to_ptr.vmem [resolvable:$true] %s321
          %327 = dma.hbm_to_vmem [thread:$0]  %s320, 3072, %s322, %s310, 192, 192, 12
        $region28: #{tpu_custom_call.1} parent=23 // pred_fallthru
          _
        // Predicated region
        $region29: #{tpu_custom_call.1} parent=23 // pred_check
          %p328 = pneg %p117
        $region30: #{tpu_custom_call.1} parent=23 // pred_check_branch
          %330 = sbr.rel (%p328) target = $region32
        $region31: #{tpu_custom_call.1} parent=23 // pred_region
          %s331 = sand.u32 %s33, 1
          %s332 = scalar_lea.sflag [#allocation9], %s331
          %s333 = sand.u32 %s107, 1
          %s334 = smul.addr %s333, 64
          %s335 = scalar_lea.vmem [#allocation8], %s334
          %337 = vsyncadd %s332, 0
          %s338 = smul.addr %s41, 16
          %s339 = smul.addr %s338, 4
          %s340 = scalar_lea.hbm %s3, %s339
          %s341 = sshll.u32 %s340, 4
          %s342 = int_to_ptr.hbm [resolvable:$true] %s341
          %s343 = sshll.u32 %s335, 4
          %s344 = int_to_ptr.vmem [resolvable:$true] %s343
          %349 = dma.hbm_to_vmem [thread:$0]  %s342, 1024, %s344, %s332, 64, 64, 4
        $region32: #{tpu_custom_call.1} parent=23 // pred_fallthru
          _
        // Predicated region
        $region33: #{tpu_custom_call.1} parent=23 // pred_check
          %p350 = pneg %p143
        $region34: #{tpu_custom_call.1} parent=23 // pred_check_branch
          %352 = sbr.rel (%p350) target = $region36
        $region35: #{tpu_custom_call.1} parent=23 // pred_region
          %s353 = sand.u32 %s33, 1
          %s354 = scalar_lea.sflag [#allocation9], %s353
          %s355 = sand.u32 %s133, 1
          %s356 = smul.addr %s355, 128
          %s357 = scalar_lea.vmem [#allocation10], %s356
          %359 = vsyncadd %s354, 0
          %s360 = smul.addr %s41, 32
          %s361 = smul.addr %s360, 4
          %s362 = scalar_lea.hbm %s4, %s361
          %s363 = sshll.u32 %s362, 4
          %s364 = int_to_ptr.hbm [resolvable:$true] %s363
          %s365 = sshll.u32 %s357, 4
          %s366 = int_to_ptr.vmem [resolvable:$true] %s365
          %371 = dma.hbm_to_vmem [thread:$0]  %s364, 2048, %s366, %s354, 128, 128, 8
        $region36: #{tpu_custom_call.1} parent=23 // pred_fallthru
          _
        // Predicated region
        $region37: #{tpu_custom_call.1} parent=23 // pred_check
          %p372 = pneg %p169
        $region38: #{tpu_custom_call.1} parent=23 // pred_check_branch
          %374 = sbr.rel (%p372) target = $region40
        $region39: #{tpu_custom_call.1} parent=23 // pred_region
          %s375 = sand.u32 %s159, 1
          %s376 = scalar_lea.sflag [#allocation12], %s375
          %s377 = sand.u32 %s159, 1
          %s378 = smul.addr %s377, 128
          %s379 = scalar_lea.vmem [#allocation11], %s378
          %381 = vsyncadd %s376, 0
          %s382 = smul.addr %s41, 32
          %s383 = smul.addr %s382, 4
          %s384 = scalar_lea.hbm %s5, %s383
          %s385 = sshll.u32 %s384, 4
          %s386 = int_to_ptr.hbm [resolvable:$true] %s385
          %s387 = sshll.u32 %s379, 4
          %s388 = int_to_ptr.vmem [resolvable:$true] %s387
          %393 = dma.hbm_to_vmem [thread:$0]  %s386, 2048, %s388, %s376, 64, 64, 4
        $region40: #{tpu_custom_call.1} parent=23 // pred_fallthru
          _
        // Predicated region
        $region41: #{tpu_custom_call.1} parent=23 // pred_check
          %p394 = pneg %p195
        $region42: #{tpu_custom_call.1} parent=23 // pred_check_branch
          %396 = sbr.rel (%p394) target = $region44
        $region43: #{tpu_custom_call.1} parent=23 // pred_region
          %p397 = scmp.lt.s32.totalorder %s41, 2
          %s398 = scalar_select %p397, %s41, 2
          %s399 = smul.addr %s398, 2
          %s400 = smul.addr %s399, 8
          %s401 = scalar_lea.vmem %s6, %s400
        $region44: #{tpu_custom_call.1} parent=23 // pred_fallthru
          _
        // Predicated region
        $region45: #{tpu_custom_call.1} parent=23 // pred_check
          %p402 = pneg %p221
        $region46: #{tpu_custom_call.1} parent=23 // pred_check_branch
          %404 = sbr.rel (%p402) target = $region48
        $region47: #{tpu_custom_call.1} parent=23 // pred_region
          %p405 = scmp.lt.s32.totalorder %s41, 2
          %s406 = scalar_select %p405, %s41, 2
          %s407 = smul.addr %s406, 2
          %s408 = scalar_lea.vmem %s7, %s407
        $region48: #{tpu_custom_call.1} parent=23 // pred_fallthru
          _
      $region24: #{tpu_custom_call.1} parent=5 // pred_fallthru
        _
      %p409 = scmp.le.s32.totalorder 1, %s33
      %p410 = scmp.lt.s32.totalorder %s33, 4
      %p411 = pnand %p409, %p410
      %p412 = pneg %p411
      // Predicated region
      $region49: #{tpu_custom_call.1} parent=5 // pred_check
        _
      $region50: #{tpu_custom_call.1} parent=5 // pred_check_branch
        %414 = sbr.rel (%p411) target = $region52
      $region51: #{tpu_custom_call.1} parent=5 // pred_region
        %s415 = ssub.s32 %s33, 1
        %s416 = sand.u32 %s84, 1
        %s417 = scalar_lea.sflag [#allocation6], %s416
        %s418 = sand.u32 %s84, 1
        %s419 = smul.addr %s418, 192
        %s420 = scalar_lea.vmem [#allocation5], %s419
        // Predicated region
        $region53: #{tpu_custom_call.1} parent=51 // pred_check
          %p421 = pneg %p97
        $region54: #{tpu_custom_call.1} parent=51 // pred_check_branch
          %423 = sbr.rel (%p421) target = $region56
        $region55: #{tpu_custom_call.1} parent=51 // pred_region
          %425 = dma.done %s417, 3072
        $region56: #{tpu_custom_call.1} parent=51 // pred_fallthru
          _
        %s426 = sand.u32 %s38, 1
        %s427 = scalar_lea.sflag [#allocation9], %s426
        %s428 = sand.u32 %s110, 1
        %s429 = smul.addr %s428, 64
        %s430 = scalar_lea.vmem [#allocation8], %s429
        // Predicated region
        $region57: #{tpu_custom_call.1} parent=51 // pred_check
          %p431 = pneg %p123
        $region58: #{tpu_custom_call.1} parent=51 // pred_check_branch
          %433 = sbr.rel (%p431) target = $region60
        $region59: #{tpu_custom_call.1} parent=51 // pred_region
          %435 = dma.done %s427, 1024
        $region60: #{tpu_custom_call.1} parent=51 // pred_fallthru
          _
        %s436 = sand.u32 %s38, 1
        %s437 = scalar_lea.sflag [#allocation9], %s436
        %s438 = sand.u32 %s136, 1
        %s439 = smul.addr %s438, 128
        %s440 = scalar_lea.vmem [#allocation10], %s439
        // Predicated region
        $region61: #{tpu_custom_call.1} parent=51 // pred_check
          %p441 = pneg %p149
        $region62: #{tpu_custom_call.1} parent=51 // pred_check_branch
          %443 = sbr.rel (%p441) target = $region64
        $region63: #{tpu_custom_call.1} parent=51 // pred_region
          %445 = dma.done %s437, 2048
        $region64: #{tpu_custom_call.1} parent=51 // pred_fallthru
          _
        %s446 = sand.u32 %s162, 1
        %s447 = scalar_lea.sflag [#allocation12], %s446
        %s448 = sand.u32 %s162, 1
        %s449 = smul.addr %s448, 128
        %s450 = scalar_lea.vmem [#allocation11], %s449
        // Predicated region
        $region65: #{tpu_custom_call.1} parent=51 // pred_check
          %p451 = pneg %p175
        $region66: #{tpu_custom_call.1} parent=51 // pred_check_branch
          %453 = sbr.rel (%p451) target = $region68
        $region67: #{tpu_custom_call.1} parent=51 // pred_region
          %455 = dma.done %s447, 2048
        $region68: #{tpu_custom_call.1} parent=51 // pred_fallthru
          _
        %s456 = smul.u32 4, %s42
        %p457 = scmp.lt.s32.totalorder %s456, 3
        %s458 = scalar_select %p457, %s456, 3
        %s459 = smul.addr %s458, 2
        %s460 = smul.addr %s459, 8
        %s461 = scalar_lea.vmem %s1, %s460
        %p462 = pneg %p71
        %p463 = pneg %p68
        %s464 = sand.u32 %s84, 1
        %s465 = scalar_lea.sflag [#allocation6], %s464
        %s466 = sand.u32 %s84, 1
        %s467 = smul.addr %s466, 192
        %s468 = scalar_lea.vmem [#allocation5], %s467
        %p469 = pneg %p97
        %p470 = pneg %p94
        %s471 = sand.u32 %s38, 1
        %s472 = scalar_lea.sflag [#allocation9], %s471
        %s473 = sand.u32 %s110, 1
        %s474 = smul.addr %s473, 64
        %s475 = scalar_lea.vmem [#allocation8], %s474
        %p476 = pneg %p123
        %p477 = pneg %p120
        %s478 = sand.u32 %s38, 1
        %s479 = scalar_lea.sflag [#allocation9], %s478
        %s480 = sand.u32 %s136, 1
        %s481 = smul.addr %s480, 128
        %s482 = scalar_lea.vmem [#allocation10], %s481
        %p483 = pneg %p149
        %p484 = pneg %p146
        %s485 = sand.u32 %s162, 1
        %s486 = scalar_lea.sflag [#allocation12], %s485
        %s487 = sand.u32 %s162, 1
        %s488 = smul.addr %s487, 128
        %s489 = scalar_lea.vmem [#allocation11], %s488
        %p490 = pneg %p175
        %p491 = pneg %p172
        %p492 = scmp.lt.s32.totalorder %s43, 2
        %s493 = scalar_select %p492, %s43, 2
        %s494 = smul.addr %s493, 2
        %s495 = smul.addr %s494, 8
        %s496 = scalar_lea.vmem %s6, %s495
        %p497 = pneg %p201
        %p498 = pneg %p198
        %p499 = scmp.lt.s32.totalorder %s43, 2
        %s500 = scalar_select %p499, %s43, 2
        %s501 = smul.addr %s500, 2
        %s502 = scalar_lea.vmem %s7, %s501
        %p503 = pneg %p227
        %p504 = pneg %p224
        %p505 = pneg %p248
        %p506 = pneg %p245
        %p507 = pneg %p274
        %p508 = pneg %p271
        %s509 = smul.u32 4, %s42
        %p510 = scmp.lt.s32.totalorder %s509, 3
        %s511 = scalar_select %p510, %s509, 3
        %s512 = smul.addr %s511, 2
        %s513 = smul.addr %s512, 8
        %s514 = scalar_lea.vmem %s1, %s513
        %s515 = smul.u32 4, %s42
        %p516 = scmp.lt.s32.totalorder %s43, 2
        %s517 = scalar_select %p516, %s43, 2
        %s518 = smul.addr %s517, 2
        %s519 = smul.addr %s518, 8
        %s520 = scalar_lea.vmem %s6, %s519
        %p521 = scmp.lt.s32.totalorder %s43, 2
        %s522 = scalar_select %p521, %s43, 2
        %s523 = smul.addr %s522, 2
        %s524 = scalar_lea.vmem %s7, %s523
        %s525 = smul.u32 4, %s42
        %p527 = scmp.eq.s32.totalorder %s43, 0
        // Predicated region
        $region69: #{tpu_custom_call.1} parent=51 // pred_check
          %p528 = pneg %p527
        $region70: #{tpu_custom_call.1} parent=51 // pred_check_branch
          %530 = sbr.rel (%p528) target = $region72
        $region71: #{tpu_custom_call.1} parent=51 // pred_region
          %v531 = vld [vmem:[%s514] sm:$0xff]
          %v532 = vld [vmem:[%s514 + $0x8] sm:$0xff]
          %v533 = vld [vmem:[%s514 + $0x10] sm:$0xff]
          %v534 = vld [vmem:[%s514 + $0x18] sm:$0xff]
          %v535 = vld [vmem:[%s514 + $0x20] sm:$0xff]
          %v536 = vld [vmem:[%s514 + $0x28] sm:$0xff]
          %v537 = vld [vmem:[%s514 + $0x30] sm:$0xff]
          %v538 = vld [vmem:[%s514 + $0x38] sm:$0xff]
          %539 = vst [vmem:[#allocation2] sm:$0xff] %v531
          %540 = vst [vmem:[#allocation2 + $0x8] sm:$0xff] %v532
          %541 = vst [vmem:[#allocation2 + $0x10] sm:$0xff] %v533
          %542 = vst [vmem:[#allocation2 + $0x18] sm:$0xff] %v534
          %543 = vst [vmem:[#allocation2 + $0x20] sm:$0xff] %v535
          %544 = vst [vmem:[#allocation2 + $0x28] sm:$0xff] %v536
          %545 = vst [vmem:[#allocation2 + $0x30] sm:$0xff] %v537
          %546 = vst [vmem:[#allocation2 + $0x38] sm:$0xff] %v538
        $region72: #{tpu_custom_call.1} parent=51 // pred_fallthru
          _
        %v547 = vld [vmem:[#allocation2] sm:$0xff]
        %v548 = vld [vmem:[#allocation2 + $0x8] sm:$0xff]
        %v549 = vld [vmem:[#allocation2 + $0x10] sm:$0xff]
        %v550 = vld [vmem:[#allocation2 + $0x18] sm:$0xff]
        %v551 = vld [vmem:[#allocation2 + $0x20] sm:$0xff]
        %v552 = vld [vmem:[#allocation2 + $0x28] sm:$0xff]
        %v553 = vld [vmem:[#allocation2 + $0x30] sm:$0xff]
        %v554 = vld [vmem:[#allocation2 + $0x38] sm:$0xff]
        %v555 = vld [vmem:[%s520] sm:$0xff]
        %v556 = vld [vmem:[%s520 + $0x8] sm:$0x1]
        %s557 = smul.u32 %s42, 4
        %v558 = vlaneseq
        %v559 = vand.u32 %v558, 127
        %v560 = vlaneseq
        %v561 = vshrl.u32 %v560, 7
        %v562 = vadd.s32 %v561, 8
        %s563 = sld [smem:[#allocation4 + %s557]]
        %v564 = vstv %s563
        %vm565 = vcmp.lt.s32.totalorder %v559, %v564
        %vm566 = vcmp.le.s32.totalorder %v559, %v561
        %vm567 = vcmp.le.s32.totalorder %v559, %v562
        %vm568 = vmand %vm565, %vm566
        %vm569 = vmand %vm565, %vm567
        %s570 = sadd.s32 %s557, 1
        %s571 = sld [smem:[#allocation4 + %s570]]
        %v572 = vstv %s571
        %vm573 = vcmp.lt.s32.totalorder %v559, %v572
        %vm574 = vmand %vm573, %vm566
        %vm575 = vmand %vm573, %vm567
        %s576 = sadd.s32 %s557, 2
        %s577 = sld [smem:[#allocation4 + %s576]]
        %v578 = vstv %s577
        %vm579 = vcmp.lt.s32.totalorder %v559, %v578
        %vm580 = vmand %vm579, %vm566
        %vm581 = vmand %vm579, %vm567
        %s582 = sadd.s32 %s557, 3
        %s583 = sld [smem:[#allocation4 + %s582]]
        %v584 = vstv %s583
        %vm585 = vcmp.lt.s32.totalorder %v559, %v584
        %vm586 = vmand %vm585, %vm566
        %vm587 = vmand %vm585, %vm567
        %588 = vadd.xlane.f32.xlu0 %v547
        %v589 = vpop.xlane.xlu0 %588
        %590 = vadd.xlane.f32.xlu0 %v548
        %v591 = vpop.xlane.xlu0 %590
        %592 = vadd.xlane.f32.xlu0 %v549
        %v593 = vpop.xlane.xlu0 %592
        %594 = vadd.xlane.f32.xlu0 %v550
        %v595 = vpop.xlane.xlu0 %594
        %596 = vadd.xlane.f32.xlu0 %v551
        %v597 = vpop.xlane.xlu0 %596
        %598 = vadd.xlane.f32.xlu0 %v552
        %v599 = vpop.xlane.xlu0 %598
        %600 = vadd.xlane.f32.xlu0 %v553
        %v601 = vpop.xlane.xlu0 %600
        %602 = vadd.xlane.f32.xlu0 %v554
        %v603 = vpop.xlane.xlu0 %602
        %v604 = vrcp.pop 128.0
        %v605 = vmul.f32 128.0, %v604
        %v606 = vsub.f32 1.0, %v605
        %v607 = vmul.f32 %v604, %v606
        %v608 = vadd.f32 %v604, %v607
        %vm609 = vweird.f32 %v604
        %v610 = vsel %vm609, %v604, %v608
        %v611 = vmul.f32 %v589, %v610
        %v612 = vmul.f32 %v591, %v610
        %v613 = vmul.f32 %v593, %v610
        %v614 = vmul.f32 %v595, %v610
        %v615 = vmul.f32 %v597, %v610
        %v616 = vmul.f32 %v599, %v610
        %v617 = vmul.f32 %v601, %v610
        %v618 = vmul.f32 %v603, %v610
        %v619 = vsub.f32 %v547, %v611
        %v620 = vsub.f32 %v548, %v612
        %v621 = vsub.f32 %v549, %v613
        %v622 = vsub.f32 %v550, %v614
        %v623 = vsub.f32 %v551, %v615
        %v624 = vsub.f32 %v552, %v616
        %v625 = vsub.f32 %v553, %v617
        %v626 = vsub.f32 %v554, %v618
        %v627 = vmul.f32 %v619, %v619
        %v628 = vmul.f32 %v620, %v620
        %v629 = vmul.f32 %v621, %v621
        %v630 = vmul.f32 %v622, %v622
        %v631 = vmul.f32 %v623, %v623
        %v632 = vmul.f32 %v624, %v624
        %v633 = vmul.f32 %v625, %v625
        %v634 = vmul.f32 %v626, %v626
        %635 = vadd.xlane.f32.xlu0 %v627
        %v636 = vpop.xlane.xlu0 %635
        %637 = vadd.xlane.f32.xlu0 %v628
        %v638 = vpop.xlane.xlu0 %637
        %639 = vadd.xlane.f32.xlu0 %v629
        %v640 = vpop.xlane.xlu0 %639
        %641 = vadd.xlane.f32.xlu0 %v630
        %v642 = vpop.xlane.xlu0 %641
        %643 = vadd.xlane.f32.xlu0 %v631
        %v644 = vpop.xlane.xlu0 %643
        %645 = vadd.xlane.f32.xlu0 %v632
        %v646 = vpop.xlane.xlu0 %645
        %647 = vadd.xlane.f32.xlu0 %v633
        %v648 = vpop.xlane.xlu0 %647
        %649 = vadd.xlane.f32.xlu0 %v634
        %v650 = vpop.xlane.xlu0 %649
        %v651 = vmul.f32 %v636, %v610
        %v652 = vmul.f32 %v638, %v610
        %v653 = vmul.f32 %v640, %v610
        %v654 = vmul.f32 %v642, %v610
        %v655 = vmul.f32 %v644, %v610
        %v656 = vmul.f32 %v646, %v610
        %v657 = vmul.f32 %v648, %v610
        %v658 = vmul.f32 %v650, %v610
        %v659 = vadd.f32 %v651, 1e-05
        %v660 = vadd.f32 %v652, 1e-05
        %v661 = vadd.f32 %v653, 1e-05
        %v662 = vadd.f32 %v654, 1e-05
        %v663 = vadd.f32 %v655, 1e-05
        %v664 = vadd.f32 %v656, 1e-05
        %v665 = vadd.f32 %v657, 1e-05
        %v666 = vadd.f32 %v658, 1e-05
        %v667 = vrsqrt.pop %v659
        %v668 = vmul.f32 %v667, %v659
        %v669 = vmul.f32 %v668, %v667
        %v670 = vmul.f32 0.5, %v669
        %v671 = vsub.f32 1.5, %v670
        %v672 = vmul.f32 %v667, %v671
        %vm673 = vweird.f32 %v659
        %vm674 = vweird.f32 %v667
        %vm675 = vmor %vm673, %vm674
        %v676 = vsel %vm675, %v667, %v672
        %v677 = vrsqrt.pop %v660
        %v678 = vmul.f32 %v677, %v660
        %v679 = vmul.f32 %v678, %v677
        %v680 = vmul.f32 0.5, %v679
        %v681 = vsub.f32 1.5, %v680
        %v682 = vmul.f32 %v677, %v681
        %vm683 = vweird.f32 %v660
        %vm684 = vweird.f32 %v677
        %vm685 = vmor %vm683, %vm684
        %v686 = vsel %vm685, %v677, %v682
        %v687 = vrsqrt.pop %v661
        %v688 = vmul.f32 %v687, %v661
        %v689 = vmul.f32 %v688, %v687
        %v690 = vmul.f32 0.5, %v689
        %v691 = vsub.f32 1.5, %v690
        %v692 = vmul.f32 %v687, %v691
        %vm693 = vweird.f32 %v661
        %vm694 = vweird.f32 %v687
        %vm695 = vmor %vm693, %vm694
        %v696 = vsel %vm695, %v687, %v692
        %v697 = vrsqrt.pop %v662
        %v698 = vmul.f32 %v697, %v662
        %v699 = vmul.f32 %v698, %v697
        %v700 = vmul.f32 0.5, %v699
        %v701 = vsub.f32 1.5, %v700
        %v702 = vmul.f32 %v697, %v701
        %vm703 = vweird.f32 %v662
        %vm704 = vweird.f32 %v697
        %vm705 = vmor %vm703, %vm704
        %v706 = vsel %vm705, %v697, %v702
        %v707 = vrsqrt.pop %v663
        %v708 = vmul.f32 %v707, %v663
        %v709 = vmul.f32 %v708, %v707
        %v710 = vmul.f32 0.5, %v709
        %v711 = vsub.f32 1.5, %v710
        %v712 = vmul.f32 %v707, %v711
        %vm713 = vweird.f32 %v663
        %vm714 = vweird.f32 %v707
        %vm715 = vmor %vm713, %vm714
        %v716 = vsel %vm715, %v707, %v712
        %v717 = vrsqrt.pop %v664
        %v718 = vmul.f32 %v717, %v664
        %v719 = vmul.f32 %v718, %v717
        %v720 = vmul.f32 0.5, %v719
        %v721 = vsub.f32 1.5, %v720
        %v722 = vmul.f32 %v717, %v721
        %vm723 = vweird.f32 %v664
        %vm724 = vweird.f32 %v717
        %vm725 = vmor %vm723, %vm724
        %v726 = vsel %vm725, %v717, %v722
        %v727 = vrsqrt.pop %v665
        %v728 = vmul.f32 %v727, %v665
        %v729 = vmul.f32 %v728, %v727
        %v730 = vmul.f32 0.5, %v729
        %v731 = vsub.f32 1.5, %v730
        %v732 = vmul.f32 %v727, %v731
        %vm733 = vweird.f32 %v665
        %vm734 = vweird.f32 %v727
        %vm735 = vmor %vm733, %vm734
        %v736 = vsel %vm735, %v727, %v732
        %v737 = vrsqrt.pop %v666
        %v738 = vmul.f32 %v737, %v666
        %v739 = vmul.f32 %v738, %v737
        %v740 = vmul.f32 0.5, %v739
        %v741 = vsub.f32 1.5, %v740
        %v742 = vmul.f32 %v737, %v741
        %vm743 = vweird.f32 %v666
        %vm744 = vweird.f32 %v737
        %vm745 = vmor %vm743, %vm744
        %v746 = vsel %vm745, %v737, %v742
        %v747 = vmul.f32 %v619, %v676
        %v748 = vmul.f32 %v620, %v686
        %v749 = vmul.f32 %v621, %v696
        %v750 = vmul.f32 %v622, %v706
        %v751 = vmul.f32 %v623, %v716
        %v752 = vmul.f32 %v624, %v726
        %v753 = vmul.f32 %v625, %v736
        %v754 = vmul.f32 %v626, %v746
        %v755 = vperm.slane %v555, 0
        %v756 = vmul.f32 %v747, %v755
        %v757 = vmul.f32 %v748, %v755
        %v758 = vmul.f32 %v749, %v755
        %v759 = vmul.f32 %v750, %v755
        %v760 = vmul.f32 %v751, %v755
        %v761 = vmul.f32 %v752, %v755
        %v762 = vmul.f32 %v753, %v755
        %v763 = vmul.f32 %v754, %v755
        %v764 = vperm.slane %v555, 1
        %v765 = vadd.f32 %v756, %v764
        %v766 = vadd.f32 %v757, %v764
        %v767 = vadd.f32 %v758, %v764
        %v768 = vadd.f32 %v759, %v764
        %v769 = vadd.f32 %v760, %v764
        %v770 = vadd.f32 %v761, %v764
        %v771 = vadd.f32 %v762, %v764
        %v772 = vadd.f32 %v763, %v764
        %v773 = vpack.c.bf16 %v766, %v765
        %v774 = vpack.c.bf16 %v768, %v767
        %v775 = vpack.c.bf16 %v770, %v769
        %v776 = vpack.c.bf16 %v772, %v771
        %v777 = vld [vmem:[%s420] sm:$0xff]
        %v778 = vld [vmem:[%s420 + $0x8] sm:$0xf]
        %v779 = vld [vmem:[%s420 + $0xc] sm:$0xff]
        %v780 = vld [vmem:[%s420 + $0x14] sm:$0xf]
        %v781 = vld [vmem:[%s420 + $0x18] sm:$0xff]
        %v782 = vld [vmem:[%s420 + $0x20] sm:$0xf]
        %v783 = vld [vmem:[%s420 + $0x24] sm:$0xff]
        %v784 = vld [vmem:[%s420 + $0x2c] sm:$0xf]
        %v785 = vld [vmem:[%s420 + $0x30] sm:$0xff]
        %v786 = vld [vmem:[%s420 + $0x38] sm:$0xf]
        %v787 = vld [vmem:[%s420 + $0x3c] sm:$0xff]
        %v788 = vld [vmem:[%s420 + $0x44] sm:$0xf]
        %v789 = vld [vmem:[%s420 + $0x48] sm:$0xff]
        %v790 = vld [vmem:[%s420 + $0x50] sm:$0xf]
        %v791 = vld [vmem:[%s420 + $0x54] sm:$0xff]
        %v792 = vld [vmem:[%s420 + $0x5c] sm:$0xf]
        %v793 = vld [vmem:[%s420 + $0x60] sm:$0xff]
        %v794 = vld [vmem:[%s420 + $0x68] sm:$0xf]
        %v795 = vld [vmem:[%s420 + $0x6c] sm:$0xff]
        %v796 = vld [vmem:[%s420 + $0x74] sm:$0xf]
        %v797 = vld [vmem:[%s420 + $0x78] sm:$0xff]
        %v798 = vld [vmem:[%s420 + $0x80] sm:$0xf]
        %v799 = vld [vmem:[%s420 + $0x84] sm:$0xff]
        %v800 = vld [vmem:[%s420 + $0x8c] sm:$0xf]
        %v801 = vld [vmem:[%s420 + $0x90] sm:$0xff]
        %v802 = vld [vmem:[%s420 + $0x98] sm:$0xf]
        %v803 = vld [vmem:[%s420 + $0x9c] sm:$0xff]
        %v804 = vld [vmem:[%s420 + $0xa4] sm:$0xf]
        %v805 = vld [vmem:[%s420 + $0xa8] sm:$0xff]
        %v806 = vld [vmem:[%s420 + $0xb0] sm:$0xf]
        %v807 = vld [vmem:[%s420 + $0xb4] sm:$0xff]
        %v808 = vld [vmem:[%s420 + $0xbc] sm:$0xf]
        %v841 = vunpack.c.l.b16 %v777
        %v842 = vunpack.c.h.b16 %v777
        %v843 = vunpack.c.l.b16 %v778
        %v844 = vunpack.c.l.b16 %v779
        %v845 = vunpack.c.h.b16 %v779
        %v846 = vunpack.c.l.b16 %v780
        %v847 = vunpack.c.l.b16 %v781
        %v848 = vunpack.c.h.b16 %v781
        %v849 = vunpack.c.l.b16 %v782
        %v850 = vunpack.c.l.b16 %v783
        %v851 = vunpack.c.h.b16 %v783
        %v852 = vunpack.c.l.b16 %v784
        %v853 = vunpack.c.l.b16 %v785
        %v854 = vunpack.c.h.b16 %v785
        %v855 = vunpack.c.l.b16 %v786
        %v856 = vunpack.c.l.b16 %v787
        %v857 = vunpack.c.h.b16 %v787
        %v858 = vunpack.c.l.b16 %v788
        %v859 = vunpack.c.l.b16 %v789
        %v860 = vunpack.c.h.b16 %v789
        %v861 = vunpack.c.l.b16 %v790
        %v862 = vunpack.c.l.b16 %v791
        %v863 = vunpack.c.h.b16 %v791
        %v864 = vunpack.c.l.b16 %v792
        %v865 = vunpack.c.l.b16 %v793
        %v866 = vunpack.c.h.b16 %v793
        %v867 = vunpack.c.l.b16 %v794
        %v868 = vunpack.c.l.b16 %v795
        %v869 = vunpack.c.h.b16 %v795
        %v870 = vunpack.c.l.b16 %v796
        %v871 = vunpack.c.l.b16 %v797
        %v872 = vunpack.c.h.b16 %v797
        %v873 = vunpack.c.l.b16 %v798
        %v874 = vunpack.c.l.b16 %v799
        %v875 = vunpack.c.h.b16 %v799
        %v876 = vunpack.c.l.b16 %v800
        %v877 = vunpack.c.l.b16 %v801
        %v878 = vunpack.c.h.b16 %v801
        %v879 = vunpack.c.l.b16 %v802
        %v880 = vunpack.c.l.b16 %v803
        %v881 = vunpack.c.h.b16 %v803
        %v882 = vunpack.c.l.b16 %v804
        %v883 = vunpack.c.l.b16 %v805
        %v884 = vunpack.c.h.b16 %v805
        %v885 = vunpack.c.l.b16 %v806
        %v886 = vunpack.c.l.b16 %v807
        %v887 = vunpack.c.h.b16 %v807
        %v888 = vunpack.c.l.b16 %v808
        %v889 = vpack.c.b16 %v844, %v841
        %v890 = vpack.c.b16 %v845, %v842
        %v891 = vpack.c.b16 %v846, %v843
        %v892 = vpack.c.b16 %v850, %v847
        %v893 = vpack.c.b16 %v851, %v848
        %v894 = vpack.c.b16 %v852, %v849
        %v895 = vpack.c.b16 %v856, %v853
        %v896 = vpack.c.b16 %v857, %v854
        %v897 = vpack.c.b16 %v858, %v855
        %v898 = vpack.c.b16 %v862, %v859
        %v899 = vpack.c.b16 %v863, %v860
        %v900 = vpack.c.b16 %v864, %v861
        %v901 = vpack.c.b16 %v868, %v865
        %v902 = vpack.c.b16 %v869, %v866
        %v903 = vpack.c.b16 %v870, %v867
        %v904 = vpack.c.b16 %v874, %v871
        %v905 = vpack.c.b16 %v875, %v872
        %v906 = vpack.c.b16 %v876, %v873
        %v907 = vpack.c.b16 %v880, %v877
        %v908 = vpack.c.b16 %v881, %v878
        %v909 = vpack.c.b16 %v882, %v879
        %v910 = vpack.c.b16 %v886, %v883
        %v911 = vpack.c.b16 %v887, %v884
        %v912 = vpack.c.b16 %v888, %v885
        %937 = vmatpush.bf16.msra.mxu0 %v910
        %938 = vmatpush.bf16.msra.mxu0 %v907
        %939 = vmatpush.bf16.msra.mxu0 %v904
        %940 = vmatpush.bf16.msra.mxu0 %v901
        %941 = vmatpush.bf16.msra.mxu0 %v898
        %942 = vmatpush.bf16.msra.mxu0 %v895
        %943 = vmatpush.bf16.msra.mxu0 %v892
        %944 = vmatpush.bf16.msra.mxu0 %v889
        %945 = vmatmul.bf16.gmra.mxu0 %v773
        %v946 = vpop.f32.mrf.mxu0
        %v947 = vadd.f32 0.0, %v946
        %v948 = vpop.f32.mrf.mxu0
        %v949 = vadd.f32 0.0, %v948
        %950 = vmatmul.bf16.gmra.mxu0 %v774
        %v951 = vpop.f32.mrf.mxu0
        %v952 = vadd.f32 0.0, %v951
        %v953 = vpop.f32.mrf.mxu0
        %v954 = vadd.f32 0.0, %v953
        %955 = vmatmul.bf16.gmra.mxu0 %v775
        %v956 = vpop.f32.mrf.mxu0
        %v957 = vadd.f32 0.0, %v956
        %v958 = vpop.f32.mrf.mxu0
        %v959 = vadd.f32 0.0, %v958
        %960 = vmatmul.bf16.gmra.mxu0 %v776
        %v961 = vpop.f32.mrf.mxu0
        %v962 = vadd.f32 0.0, %v961
        %v963 = vpop.f32.mrf.mxu0
        %v964 = vadd.f32 0.0, %v963
        %965 = vdwg.mxu0
        %966 = vmatpush.bf16.msra.mxu0 %v911
        %967 = vmatpush.bf16.msra.mxu0 %v908
        %968 = vmatpush.bf16.msra.mxu0 %v905
        %969 = vmatpush.bf16.msra.mxu0 %v902
        %970 = vmatpush.bf16.msra.mxu0 %v899
        %971 = vmatpush.bf16.msra.mxu0 %v896
        %972 = vmatpush.bf16.msra.mxu0 %v893
        %973 = vmatpush.bf16.msra.mxu0 %v890
        %974 = vmatmul.bf16.gmra.mxu0 %v773
        %v975 = vpop.f32.mrf.mxu0
        %v976 = vadd.f32 0.0, %v975
        %v977 = vpop.f32.mrf.mxu0
        %v978 = vadd.f32 0.0, %v977
        %979 = vmatmul.bf16.gmra.mxu0 %v774
        %v980 = vpop.f32.mrf.mxu0
        %v981 = vadd.f32 0.0, %v980
        %v982 = vpop.f32.mrf.mxu0
        %v983 = vadd.f32 0.0, %v982
        %984 = vmatmul.bf16.gmra.mxu0 %v775
        %v985 = vpop.f32.mrf.mxu0
        %v986 = vadd.f32 0.0, %v985
        %v987 = vpop.f32.mrf.mxu0
        %v988 = vadd.f32 0.0, %v987
        %989 = vmatmul.bf16.gmra.mxu0 %v776
        %v990 = vpop.f32.mrf.mxu0
        %v991 = vadd.f32 0.0, %v990
        %v992 = vpop.f32.mrf.mxu0
        %v993 = vadd.f32 0.0, %v992
        %994 = vdwg.mxu0
        %995 = vmatpush.bf16.msra.mxu0 %v912
        %996 = vmatpush.bf16.msra.mxu0 %v909
        %997 = vmatpush.bf16.msra.mxu0 %v906
        %998 = vmatpush.bf16.msra.mxu0 %v903
        %999 = vmatpush.bf16.msra.mxu0 %v900
        %1000 = vmatpush.bf16.msra.mxu0 %v897
        %1001 = vmatpush.bf16.msra.mxu0 %v894
        %1002 = vmatpush.bf16.msra.mxu0 %v891
        %1003 = vmatmul.bf16.gmra.mxu0 %v773
        %v1004 = vpop.f32.mrf.mxu0
        %v1005 = vadd.f32 0.0, %v1004
        %v1006 = vpop.f32.mrf.mxu0
        %v1007 = vadd.f32 0.0, %v1006
        %1008 = vmatmul.bf16.gmra.mxu0 %v774
        %v1009 = vpop.f32.mrf.mxu0
        %v1010 = vadd.f32 0.0, %v1009
        %v1011 = vpop.f32.mrf.mxu0
        %v1012 = vadd.f32 0.0, %v1011
        %1013 = vmatmul.bf16.gmra.mxu0 %v775
        %v1014 = vpop.f32.mrf.mxu0
        %v1015 = vadd.f32 0.0, %v1014
        %v1016 = vpop.f32.mrf.mxu0
        %v1017 = vadd.f32 0.0, %v1016
        %1018 = vmatmul.bf16.gmra.mxu0 %v776
        %v1019 = vpop.f32.mrf.mxu0
        %v1020 = vadd.f32 0.0, %v1019
        %v1021 = vpop.f32.mrf.mxu0
        %v1022 = vadd.f32 0.0, %v1021
        %1023 = vdwg.mxu0
        %v1024 = vperm.slane %v555, 4
        %v1025 = vadd.f32 %v947, %v1024
        %v1026 = vadd.f32 %v949, %v1024
        %v1027 = vadd.f32 %v952, %v1024
        %v1028 = vadd.f32 %v954, %v1024
        %v1029 = vadd.f32 %v957, %v1024
        %v1030 = vadd.f32 %v959, %v1024
        %v1031 = vadd.f32 %v962, %v1024
        %v1032 = vadd.f32 %v964, %v1024
        %v1033 = vmul.f32 %v1025, 0.088388346
        %v1034 = vmul.f32 %v1026, 0.088388346
        %v1035 = vmul.f32 %v1027, 0.088388346
        %v1036 = vmul.f32 %v1028, 0.088388346
        %v1037 = vmul.f32 %v1029, 0.088388346
        %v1038 = vmul.f32 %v1030, 0.088388346
        %v1039 = vmul.f32 %v1031, 0.088388346
        %v1040 = vmul.f32 %v1032, 0.088388346
        %v1041 = vperm.slane %v555, 5
        %v1042 = vadd.f32 %v976, %v1041
        %v1043 = vadd.f32 %v978, %v1041
        %v1044 = vadd.f32 %v981, %v1041
        %v1045 = vadd.f32 %v983, %v1041
        %v1046 = vadd.f32 %v986, %v1041
        %v1047 = vadd.f32 %v988, %v1041
        %v1048 = vadd.f32 %v991, %v1041
        %v1049 = vadd.f32 %v993, %v1041
        %v1050 = vperm.slane %v555, 6
        %v1051 = vadd.f32 %v1005, %v1050
        %v1052 = vadd.f32 %v1007, %v1050
        %v1053 = vadd.f32 %v1010, %v1050
        %v1054 = vadd.f32 %v1012, %v1050
        %v1055 = vadd.f32 %v1015, %v1050
        %v1056 = vadd.f32 %v1017, %v1050
        %v1057 = vadd.f32 %v1020, %v1050
        %v1058 = vadd.f32 %v1022, %v1050
        %v1059 = vpack.c.bf16 %v1033, %v1033
        %v1060 = vpack.c.bf16 %v1034, %v1034
        %v1061 = vpack.c.bf16 %v1035, %v1035
        %v1062 = vpack.c.bf16 %v1036, %v1036
        %v1063 = vpack.c.bf16 %v1037, %v1037
        %v1064 = vpack.c.bf16 %v1038, %v1038
        %v1065 = vpack.c.bf16 %v1039, %v1039
        %v1066 = vpack.c.bf16 %v1040, %v1040
        %v1067 = vpack.c.bf16 %v1042, %v1042
        %v1068 = vpack.c.bf16 %v1043, %v1043
        %v1069 = vpack.c.bf16 %v1044, %v1044
        %v1070 = vpack.c.bf16 %v1045, %v1045
        %v1071 = vpack.c.bf16 %v1046, %v1046
        %v1072 = vpack.c.bf16 %v1047, %v1047
        %v1073 = vpack.c.bf16 %v1048, %v1048
        %v1074 = vpack.c.bf16 %v1049, %v1049
        %v1075 = vpack.c.bf16 %v1051, %v1051
        %v1076 = vpack.c.bf16 %v1052, %v1052
        %v1077 = vpack.c.bf16 %v1053, %v1053
        %v1078 = vpack.c.bf16 %v1054, %v1054
        %v1079 = vpack.c.bf16 %v1055, %v1055
        %v1080 = vpack.c.bf16 %v1056, %v1056
        %v1081 = vpack.c.bf16 %v1057, %v1057
        %v1082 = vpack.c.bf16 %v1058, %v1058
        %v1085 = vunpack.c.l.b16 %v1059
        %v1086 = vunpack.c.l.b16 %v1060
        %v1087 = vpack.c.b16 %v1086, %v1085
        %v1091 = vunpack.c.l.b16 %v1067
        %v1092 = vunpack.c.l.b16 %v1068
        %v1093 = vpack.c.b16 %v1092, %v1091
        %1095 = vmatpush.bf16.xpose.msra.mxu0 0
        %1096 = vmatpush.bf16.xpose.msra.mxu0 0
        %1097 = vmatpush.bf16.xpose.msra.mxu0 0
        %1098 = vmatpush.bf16.xpose.msra.mxu0 0
        %1099 = vmatpush.bf16.xpose.msra.mxu0 0
        %1100 = vmatpush.bf16.xpose.msra.mxu0 0
        %1101 = vmatpush.bf16.xpose.msra.mxu0 0
        %1102 = vmatpush.bf16.xpose.msra.mxu0 %v1093
        %1103 = vmatmul.bf16.gmra.mxu0 %v1087
        %v1104 = vpop.f32.mrf.mxu0
        %v1105 = vadd.f32 0.0, %v1104
        %v1106 = vpop.f32.mrf.mxu0
        %v1107 = vadd.f32 0.0, %v1106
        %1108 = vdwg.mxu0
        %v1111 = vunpack.c.l.b16 %v1061
        %v1112 = vunpack.c.l.b16 %v1062
        %v1113 = vpack.c.b16 %v1112, %v1111
        %v1117 = vunpack.c.l.b16 %v1069
        %v1118 = vunpack.c.l.b16 %v1070
        %v1119 = vpack.c.b16 %v1118, %v1117
        %1121 = vmatpush.bf16.xpose.msra.mxu0 0
        %1122 = vmatpush.bf16.xpose.msra.mxu0 0
        %1123 = vmatpush.bf16.xpose.msra.mxu0 0
        %1124 = vmatpush.bf16.xpose.msra.mxu0 0
        %1125 = vmatpush.bf16.xpose.msra.mxu0 0
        %1126 = vmatpush.bf16.xpose.msra.mxu0 0
        %1127 = vmatpush.bf16.xpose.msra.mxu0 0
        %1128 = vmatpush.bf16.xpose.msra.mxu0 %v1119
        %1129 = vmatmul.bf16.gmra.mxu0 %v1113
        %v1130 = vpop.f32.mrf.mxu0
        %v1131 = vadd.f32 0.0, %v1130
        %v1132 = vpop.f32.mrf.mxu0
        %v1133 = vadd.f32 0.0, %v1132
        %1134 = vdwg.mxu0
        %v1137 = vunpack.c.l.b16 %v1063
        %v1138 = vunpack.c.l.b16 %v1064
        %v1139 = vpack.c.b16 %v1138, %v1137
        %v1143 = vunpack.c.l.b16 %v1071
        %v1144 = vunpack.c.l.b16 %v1072
        %v1145 = vpack.c.b16 %v1144, %v1143
        %1147 = vmatpush.bf16.xpose.msra.mxu0 0
        %1148 = vmatpush.bf16.xpose.msra.mxu0 0
        %1149 = vmatpush.bf16.xpose.msra.mxu0 0
        %1150 = vmatpush.bf16.xpose.msra.mxu0 0
        %1151 = vmatpush.bf16.xpose.msra.mxu0 0
        %1152 = vmatpush.bf16.xpose.msra.mxu0 0
        %1153 = vmatpush.bf16.xpose.msra.mxu0 0
        %1154 = vmatpush.bf16.xpose.msra.mxu0 %v1145
        %1155 = vmatmul.bf16.gmra.mxu0 %v1139
        %v1156 = vpop.f32.mrf.mxu0
        %v1157 = vadd.f32 0.0, %v1156
        %v1158 = vpop.f32.mrf.mxu0
        %v1159 = vadd.f32 0.0, %v1158
        %1160 = vdwg.mxu0
        %v1163 = vunpack.c.l.b16 %v1065
        %v1164 = vunpack.c.l.b16 %v1066
        %v1165 = vpack.c.b16 %v1164, %v1163
        %v1169 = vunpack.c.l.b16 %v1073
        %v1170 = vunpack.c.l.b16 %v1074
        %v1171 = vpack.c.b16 %v1170, %v1169
        %1173 = vmatpush.bf16.xpose.msra.mxu0 0
        %1174 = vmatpush.bf16.xpose.msra.mxu0 0
        %1175 = vmatpush.bf16.xpose.msra.mxu0 0
        %1176 = vmatpush.bf16.xpose.msra.mxu0 0
        %1177 = vmatpush.bf16.xpose.msra.mxu0 0
        %1178 = vmatpush.bf16.xpose.msra.mxu0 0
        %1179 = vmatpush.bf16.xpose.msra.mxu0 0
        %1180 = vmatpush.bf16.xpose.msra.mxu0 %v1171
        %1181 = vmatmul.bf16.gmra.mxu0 %v1165
        %v1182 = vpop.f32.mrf.mxu0
        %v1183 = vadd.f32 0.0, %v1182
        %v1184 = vpop.f32.mrf.mxu0
        %v1185 = vadd.f32 0.0, %v1184
        %1186 = vdwg.mxu0
        %v1187 = vsel %vm568, %v1105, -1e+30
        %v1188 = vsel %vm569, %v1107, -1e+30
        %v1189 = vsel %vm574, %v1131, -1e+30
        %v1190 = vsel %vm575, %v1133, -1e+30
        %v1191 = vsel %vm580, %v1157, -1e+30
        %v1192 = vsel %vm581, %v1159, -1e+30
        %v1193 = vsel %vm586, %v1183, -1e+30
        %v1194 = vsel %vm587, %v1185, -1e+30
        %vm1195 = vcmask 130048
        %v1196 = vsel %vm1195, %v1187, -inf
        %1197 = vmax.xlane.f32.xlu0 %v1196
        %v1198 = vpop.xlane.xlu0 %1197
        %v1199 = vsel %vm1195, %v1188, -inf
        %1200 = vmax.xlane.f32.xlu0 %v1199
        %v1201 = vpop.xlane.xlu0 %1200
        %v1202 = vsel %vm1195, %v1189, -inf
        %1203 = vmax.xlane.f32.xlu0 %v1202
        %v1204 = vpop.xlane.xlu0 %1203
        %v1205 = vsel %vm1195, %v1190, -inf
        %1206 = vmax.xlane.f32.xlu0 %v1205
        %v1207 = vpop.xlane.xlu0 %1206
        %v1208 = vsel %vm1195, %v1191, -inf
        %1209 = vmax.xlane.f32.xlu0 %v1208
        %v1210 = vpop.xlane.xlu0 %1209
        %v1211 = vsel %vm1195, %v1192, -inf
        %1212 = vmax.xlane.f32.xlu0 %v1211
        %v1213 = vpop.xlane.xlu0 %1212
        %v1214 = vsel %vm1195, %v1193, -inf
        %1215 = vmax.xlane.f32.xlu0 %v1214
        %v1216 = vpop.xlane.xlu0 %1215
        %v1217 = vsel %vm1195, %v1194, -inf
        %1218 = vmax.xlane.f32.xlu0 %v1217
        %v1219 = vpop.xlane.xlu0 %1218
        %v1220 = vsub.f32 %v1187, %v1198
        %v1221 = vsub.f32 %v1188, %v1201
        %v1222 = vsub.f32 %v1189, %v1204
        %v1223 = vsub.f32 %v1190, %v1207
        %v1224 = vsub.f32 %v1191, %v1210
        %v1225 = vsub.f32 %v1192, %v1213
        %v1226 = vsub.f32 %v1193, %v1216
        %v1227 = vsub.f32 %v1194, %v1219
        %v1228 = vmul.f32 %v1220, 1.442695
        %v1229 = vpow.pop %v1228
        %v1230 = vmul.f32 %v1221, 1.442695
        %v1231 = vpow.pop %v1230
        %v1232 = vmul.f32 %v1222, 1.442695
        %v1233 = vpow.pop %v1232
        %v1234 = vmul.f32 %v1223, 1.442695
        %v1235 = vpow.pop %v1234
        %v1236 = vmul.f32 %v1224, 1.442695
        %v1237 = vpow.pop %v1236
        %v1238 = vmul.f32 %v1225, 1.442695
        %v1239 = vpow.pop %v1238
        %v1240 = vmul.f32 %v1226, 1.442695
        %v1241 = vpow.pop %v1240
        %v1242 = vmul.f32 %v1227, 1.442695
        %v1243 = vpow.pop %v1242
        %v1244 = vsel %vm1195, %v1229, 0.0
        %1245 = vadd.xlane.f32.xlu0 %v1244
        %v1246 = vpop.xlane.xlu0 %1245
        %v1247 = vsel %vm1195, %v1231, 0.0
        %1248 = vadd.xlane.f32.xlu0 %v1247
        %v1249 = vpop.xlane.xlu0 %1248
        %v1250 = vsel %vm1195, %v1233, 0.0
        %1251 = vadd.xlane.f32.xlu0 %v1250
        %v1252 = vpop.xlane.xlu0 %1251
        %v1253 = vsel %vm1195, %v1235, 0.0
        %1254 = vadd.xlane.f32.xlu0 %v1253
        %v1255 = vpop.xlane.xlu0 %1254
        %v1256 = vsel %vm1195, %v1237, 0.0
        %1257 = vadd.xlane.f32.xlu0 %v1256
        %v1258 = vpop.xlane.xlu0 %1257
        %v1259 = vsel %vm1195, %v1239, 0.0
        %1260 = vadd.xlane.f32.xlu0 %v1259
        %v1261 = vpop.xlane.xlu0 %1260
        %v1262 = vsel %vm1195, %v1241, 0.0
        %1263 = vadd.xlane.f32.xlu0 %v1262
        %v1264 = vpop.xlane.xlu0 %1263
        %v1265 = vsel %vm1195, %v1243, 0.0
        %1266 = vadd.xlane.f32.xlu0 %v1265
        %v1267 = vpop.xlane.xlu0 %1266
        %v1268 = vpack.c.bf16 %v1229, %v1229
        %v1269 = vpack.c.bf16 %v1231, %v1231
        %v1270 = vpack.c.bf16 %v1233, %v1233
        %v1271 = vpack.c.bf16 %v1235, %v1235
        %v1272 = vpack.c.bf16 %v1237, %v1237
        %v1273 = vpack.c.bf16 %v1239, %v1239
        %v1274 = vpack.c.bf16 %v1241, %v1241
        %v1275 = vpack.c.bf16 %v1243, %v1243
        %v1278 = vunpack.c.l.b16 %v1268
        %v1279 = vunpack.c.l.b16 %v1269
        %v1280 = vpack.c.b16 %v1279, %v1278
        %v1283 = vunpack.c.l.b16 %v1075
        %v1284 = vunpack.c.l.b16 %v1076
        %v1285 = vpack.c.b16 %v1284, %v1283
        %v1288 = vsel %vm1195, %v1280, 0
        %1290 = vmatpush.bf16.msra.mxu0 0
        %1291 = vmatpush.bf16.msra.mxu0 0
        %1292 = vmatpush.bf16.msra.mxu0 0
        %1293 = vmatpush.bf16.msra.mxu0 0
        %1294 = vmatpush.bf16.msra.mxu0 0
        %1295 = vmatpush.bf16.msra.mxu0 0
        %1296 = vmatpush.bf16.msra.mxu0 0
        %1297 = vmatpush.bf16.msra.mxu0 %v1285
        %1298 = vmatmul.bf16.gmra.mxu0 %v1288
        %v1299 = vpop.f32.mrf.mxu0
        %v1300 = vadd.f32 0.0, %v1299
        %v1301 = vpop.f32.mrf.mxu0
        %v1302 = vadd.f32 0.0, %v1301
        %1303 = vdwg.mxu0
        %v1306 = vunpack.c.l.b16 %v1270
        %v1307 = vunpack.c.l.b16 %v1271
        %v1308 = vpack.c.b16 %v1307, %v1306
        %v1311 = vunpack.c.l.b16 %v1077
        %v1312 = vunpack.c.l.b16 %v1078
        %v1313 = vpack.c.b16 %v1312, %v1311
        %v1316 = vsel %vm1195, %v1308, 0
        %1318 = vmatpush.bf16.msra.mxu0 0
        %1319 = vmatpush.bf16.msra.mxu0 0
        %1320 = vmatpush.bf16.msra.mxu0 0
        %1321 = vmatpush.bf16.msra.mxu0 0
        %1322 = vmatpush.bf16.msra.mxu0 0
        %1323 = vmatpush.bf16.msra.mxu0 0
        %1324 = vmatpush.bf16.msra.mxu0 0
        %1325 = vmatpush.bf16.msra.mxu0 %v1313
        %1326 = vmatmul.bf16.gmra.mxu0 %v1316
        %v1327 = vpop.f32.mrf.mxu0
        %v1328 = vadd.f32 0.0, %v1327
        %v1329 = vpop.f32.mrf.mxu0
        %v1330 = vadd.f32 0.0, %v1329
        %1331 = vdwg.mxu0
        %v1334 = vunpack.c.l.b16 %v1272
        %v1335 = vunpack.c.l.b16 %v1273
        %v1336 = vpack.c.b16 %v1335, %v1334
        %v1339 = vunpack.c.l.b16 %v1079
        %v1340 = vunpack.c.l.b16 %v1080
        %v1341 = vpack.c.b16 %v1340, %v1339
        %v1344 = vsel %vm1195, %v1336, 0
        %1346 = vmatpush.bf16.msra.mxu0 0
        %1347 = vmatpush.bf16.msra.mxu0 0
        %1348 = vmatpush.bf16.msra.mxu0 0
        %1349 = vmatpush.bf16.msra.mxu0 0
        %1350 = vmatpush.bf16.msra.mxu0 0
        %1351 = vmatpush.bf16.msra.mxu0 0
        %1352 = vmatpush.bf16.msra.mxu0 0
        %1353 = vmatpush.bf16.msra.mxu0 %v1341
        %1354 = vmatmul.bf16.gmra.mxu0 %v1344
        %v1355 = vpop.f32.mrf.mxu0
        %v1356 = vadd.f32 0.0, %v1355
        %v1357 = vpop.f32.mrf.mxu0
        %v1358 = vadd.f32 0.0, %v1357
        %1359 = vdwg.mxu0
        %v1362 = vunpack.c.l.b16 %v1274
        %v1363 = vunpack.c.l.b16 %v1275
        %v1364 = vpack.c.b16 %v1363, %v1362
        %v1367 = vunpack.c.l.b16 %v1081
        %v1368 = vunpack.c.l.b16 %v1082
        %v1369 = vpack.c.b16 %v1368, %v1367
        %v1372 = vsel %vm1195, %v1364, 0
        %1374 = vmatpush.bf16.msra.mxu0 0
        %1375 = vmatpush.bf16.msra.mxu0 0
        %1376 = vmatpush.bf16.msra.mxu0 0
        %1377 = vmatpush.bf16.msra.mxu0 0
        %1378 = vmatpush.bf16.msra.mxu0 0
        %1379 = vmatpush.bf16.msra.mxu0 0
        %1380 = vmatpush.bf16.msra.mxu0 0
        %1381 = vmatpush.bf16.msra.mxu0 %v1369
        %1382 = vmatmul.bf16.gmra.mxu0 %v1372
        %v1383 = vpop.f32.mrf.mxu0
        %v1384 = vadd.f32 0.0, %v1383
        %v1385 = vpop.f32.mrf.mxu0
        %v1386 = vadd.f32 0.0, %v1385
        %1387 = vdwg.mxu0
        %v1388 = vrcp.pop %v1246
        %v1389 = vrcp.pop %v1249
        %v1390 = vrcp.pop %v1252
        %v1391 = vrcp.pop %v1255
        %v1392 = vrcp.pop %v1258
        %v1393 = vrcp.pop %v1261
        %v1394 = vrcp.pop %v1264
        %v1395 = vrcp.pop %v1267
        %v1396 = vmul.f32 %v1300, %v1388
        %v1397 = vmul.f32 %v1302, %v1389
        %v1398 = vmul.f32 %v1328, %v1390
        %v1399 = vmul.f32 %v1330, %v1391
        %v1400 = vmul.f32 %v1356, %v1392
        %v1401 = vmul.f32 %v1358, %v1393
        %v1402 = vmul.f32 %v1384, %v1394
        %v1403 = vmul.f32 %v1386, %v1395
        %v1404 = vpack.c.bf16 %v1397, %v1396
        %v1405 = vpack.c.bf16 %v1399, %v1398
        %v1406 = vpack.c.bf16 %v1401, %v1400
        %v1407 = vpack.c.bf16 %v1403, %v1402
        %v1408 = vld [vmem:[%s430] sm:$0xf]
        %v1409 = vld [vmem:[%s430 + $0x4] sm:$0xf]
        %v1410 = vld [vmem:[%s430 + $0x8] sm:$0xf]
        %v1411 = vld [vmem:[%s430 + $0xc] sm:$0xf]
        %v1412 = vld [vmem:[%s430 + $0x10] sm:$0xf]
        %v1413 = vld [vmem:[%s430 + $0x14] sm:$0xf]
        %v1414 = vld [vmem:[%s430 + $0x18] sm:$0xf]
        %v1415 = vld [vmem:[%s430 + $0x1c] sm:$0xf]
        %v1416 = vld [vmem:[%s430 + $0x20] sm:$0xf]
        %v1417 = vld [vmem:[%s430 + $0x24] sm:$0xf]
        %v1418 = vld [vmem:[%s430 + $0x28] sm:$0xf]
        %v1419 = vld [vmem:[%s430 + $0x2c] sm:$0xf]
        %v1420 = vld [vmem:[%s430 + $0x30] sm:$0xf]
        %v1421 = vld [vmem:[%s430 + $0x34] sm:$0xf]
        %v1422 = vld [vmem:[%s430 + $0x38] sm:$0xf]
        %v1423 = vld [vmem:[%s430 + $0x3c] sm:$0xf]
        %v1440 = vunpack.c.l.b16 %v1408
        %v1441 = vunpack.c.l.b16 %v1409
        %v1442 = vunpack.c.l.b16 %v1410
        %v1443 = vunpack.c.l.b16 %v1411
        %v1444 = vunpack.c.l.b16 %v1412
        %v1445 = vunpack.c.l.b16 %v1413
        %v1446 = vunpack.c.l.b16 %v1414
        %v1447 = vunpack.c.l.b16 %v1415
        %v1448 = vunpack.c.l.b16 %v1416
        %v1449 = vunpack.c.l.b16 %v1417
        %v1450 = vunpack.c.l.b16 %v1418
        %v1451 = vunpack.c.l.b16 %v1419
        %v1452 = vunpack.c.l.b16 %v1420
        %v1453 = vunpack.c.l.b16 %v1421
        %v1454 = vunpack.c.l.b16 %v1422
        %v1455 = vunpack.c.l.b16 %v1423
        %v1456 = vpack.c.b16 %v1441, %v1440
        %v1457 = vpack.c.b16 %v1443, %v1442
        %v1458 = vpack.c.b16 %v1445, %v1444
        %v1459 = vpack.c.b16 %v1447, %v1446
        %v1460 = vpack.c.b16 %v1449, %v1448
        %v1461 = vpack.c.b16 %v1451, %v1450
        %v1462 = vpack.c.b16 %v1453, %v1452
        %v1463 = vpack.c.b16 %v1455, %v1454
        %1472 = vmatpush.bf16.msra.mxu0 %v1463
        %1473 = vmatpush.bf16.msra.mxu0 %v1462
        %1474 = vmatpush.bf16.msra.mxu0 %v1461
        %1475 = vmatpush.bf16.msra.mxu0 %v1460
        %1476 = vmatpush.bf16.msra.mxu0 %v1459
        %1477 = vmatpush.bf16.msra.mxu0 %v1458
        %1478 = vmatpush.bf16.msra.mxu0 %v1457
        %1479 = vmatpush.bf16.msra.mxu0 %v1456
        %1480 = vmatmul.bf16.gmra.mxu0 %v1404
        %v1481 = vpop.f32.mrf.mxu0
        %v1482 = vadd.f32 0.0, %v1481
        %v1483 = vpop.f32.mrf.mxu0
        %v1484 = vadd.f32 0.0, %v1483
        %1485 = vmatmul.bf16.gmra.mxu0 %v1405
        %v1486 = vpop.f32.mrf.mxu0
        %v1487 = vadd.f32 0.0, %v1486
        %v1488 = vpop.f32.mrf.mxu0
        %v1489 = vadd.f32 0.0, %v1488
        %1490 = vmatmul.bf16.gmra.mxu0 %v1406
        %v1491 = vpop.f32.mrf.mxu0
        %v1492 = vadd.f32 0.0, %v1491
        %v1493 = vpop.f32.mrf.mxu0
        %v1494 = vadd.f32 0.0, %v1493
        %1495 = vmatmul.bf16.gmra.mxu0 %v1407
        %v1496 = vpop.f32.mrf.mxu0
        %v1497 = vadd.f32 0.0, %v1496
        %v1498 = vpop.f32.mrf.mxu0
        %v1499 = vadd.f32 0.0, %v1498
        %1500 = vdwg.mxu0
        %v1501 = vadd.f32 %v547, %v1482
        %v1502 = vadd.f32 %v548, %v1484
        %v1503 = vadd.f32 %v549, %v1487
        %v1504 = vadd.f32 %v550, %v1489
        %v1505 = vadd.f32 %v551, %v1492
        %v1506 = vadd.f32 %v552, %v1494
        %v1507 = vadd.f32 %v553, %v1497
        %v1508 = vadd.f32 %v554, %v1499
        %v1509 = vperm.slane %v555, 7
        %v1510 = vadd.f32 %v1501, %v1509
        %v1511 = vadd.f32 %v1502, %v1509
        %v1512 = vadd.f32 %v1503, %v1509
        %v1513 = vadd.f32 %v1504, %v1509
        %v1514 = vadd.f32 %v1505, %v1509
        %v1515 = vadd.f32 %v1506, %v1509
        %v1516 = vadd.f32 %v1507, %v1509
        %v1517 = vadd.f32 %v1508, %v1509
        %1518 = vadd.xlane.f32.xlu0 %v1510
        %v1519 = vpop.xlane.xlu0 %1518
        %1520 = vadd.xlane.f32.xlu0 %v1511
        %v1521 = vpop.xlane.xlu0 %1520
        %1522 = vadd.xlane.f32.xlu0 %v1512
        %v1523 = vpop.xlane.xlu0 %1522
        %1524 = vadd.xlane.f32.xlu0 %v1513
        %v1525 = vpop.xlane.xlu0 %1524
        %1526 = vadd.xlane.f32.xlu0 %v1514
        %v1527 = vpop.xlane.xlu0 %1526
        %1528 = vadd.xlane.f32.xlu0 %v1515
        %v1529 = vpop.xlane.xlu0 %1528
        %1530 = vadd.xlane.f32.xlu0 %v1516
        %v1531 = vpop.xlane.xlu0 %1530
        %1532 = vadd.xlane.f32.xlu0 %v1517
        %v1533 = vpop.xlane.xlu0 %1532
        %v1534 = vmul.f32 %v1519, %v610
        %v1535 = vmul.f32 %v1521, %v610
        %v1536 = vmul.f32 %v1523, %v610
        %v1537 = vmul.f32 %v1525, %v610
        %v1538 = vmul.f32 %v1527, %v610
        %v1539 = vmul.f32 %v1529, %v610
        %v1540 = vmul.f32 %v1531, %v610
        %v1541 = vmul.f32 %v1533, %v610
        %v1542 = vsub.f32 %v1510, %v1534
        %v1543 = vsub.f32 %v1511, %v1535
        %v1544 = vsub.f32 %v1512, %v1536
        %v1545 = vsub.f32 %v1513, %v1537
        %v1546 = vsub.f32 %v1514, %v1538
        %v1547 = vsub.f32 %v1515, %v1539
        %v1548 = vsub.f32 %v1516, %v1540
        %v1549 = vsub.f32 %v1517, %v1541
        %v1550 = vmul.f32 %v1542, %v1542
        %v1551 = vmul.f32 %v1543, %v1543
        %v1552 = vmul.f32 %v1544, %v1544
        %v1553 = vmul.f32 %v1545, %v1545
        %v1554 = vmul.f32 %v1546, %v1546
        %v1555 = vmul.f32 %v1547, %v1547
        %v1556 = vmul.f32 %v1548, %v1548
        %v1557 = vmul.f32 %v1549, %v1549
        %1558 = vadd.xlane.f32.xlu0 %v1550
        %v1559 = vpop.xlane.xlu0 %1558
        %1560 = vadd.xlane.f32.xlu0 %v1551
        %v1561 = vpop.xlane.xlu0 %1560
        %1562 = vadd.xlane.f32.xlu0 %v1552
        %v1563 = vpop.xlane.xlu0 %1562
        %1564 = vadd.xlane.f32.xlu0 %v1553
        %v1565 = vpop.xlane.xlu0 %1564
        %1566 = vadd.xlane.f32.xlu0 %v1554
        %v1567 = vpop.xlane.xlu0 %1566
        %1568 = vadd.xlane.f32.xlu0 %v1555
        %v1569 = vpop.xlane.xlu0 %1568
        %1570 = vadd.xlane.f32.xlu0 %v1556
        %v1571 = vpop.xlane.xlu0 %1570
        %1572 = vadd.xlane.f32.xlu0 %v1557
        %v1573 = vpop.xlane.xlu0 %1572
        %v1574 = vmul.f32 %v1559, %v610
        %v1575 = vmul.f32 %v1561, %v610
        %v1576 = vmul.f32 %v1563, %v610
        %v1577 = vmul.f32 %v1565, %v610
        %v1578 = vmul.f32 %v1567, %v610
        %v1579 = vmul.f32 %v1569, %v610
        %v1580 = vmul.f32 %v1571, %v610
        %v1581 = vmul.f32 %v1573, %v610
        %v1582 = vadd.f32 %v1574, 1e-05
        %v1583 = vadd.f32 %v1575, 1e-05
        %v1584 = vadd.f32 %v1576, 1e-05
        %v1585 = vadd.f32 %v1577, 1e-05
        %v1586 = vadd.f32 %v1578, 1e-05
        %v1587 = vadd.f32 %v1579, 1e-05
        %v1588 = vadd.f32 %v1580, 1e-05
        %v1589 = vadd.f32 %v1581, 1e-05
        %v1590 = vrsqrt.pop %v1582
        %v1591 = vmul.f32 %v1590, %v1582
        %v1592 = vmul.f32 %v1591, %v1590
        %v1593 = vmul.f32 0.5, %v1592
        %v1594 = vsub.f32 1.5, %v1593
        %v1595 = vmul.f32 %v1590, %v1594
        %vm1596 = vweird.f32 %v1582
        %vm1597 = vweird.f32 %v1590
        %vm1598 = vmor %vm1596, %vm1597
        %v1599 = vsel %vm1598, %v1590, %v1595
        %v1600 = vrsqrt.pop %v1583
        %v1601 = vmul.f32 %v1600, %v1583
        %v1602 = vmul.f32 %v1601, %v1600
        %v1603 = vmul.f32 0.5, %v1602
        %v1604 = vsub.f32 1.5, %v1603
        %v1605 = vmul.f32 %v1600, %v1604
        %vm1606 = vweird.f32 %v1583
        %vm1607 = vweird.f32 %v1600
        %vm1608 = vmor %vm1606, %vm1607
        %v1609 = vsel %vm1608, %v1600, %v1605
        %v1610 = vrsqrt.pop %v1584
        %v1611 = vmul.f32 %v1610, %v1584
        %v1612 = vmul.f32 %v1611, %v1610
        %v1613 = vmul.f32 0.5, %v1612
        %v1614 = vsub.f32 1.5, %v1613
        %v1615 = vmul.f32 %v1610, %v1614
        %vm1616 = vweird.f32 %v1584
        %vm1617 = vweird.f32 %v1610
        %vm1618 = vmor %vm1616, %vm1617
        %v1619 = vsel %vm1618, %v1610, %v1615
        %v1620 = vrsqrt.pop %v1585
        %v1621 = vmul.f32 %v1620, %v1585
        %v1622 = vmul.f32 %v1621, %v1620
        %v1623 = vmul.f32 0.5, %v1622
        %v1624 = vsub.f32 1.5, %v1623
        %v1625 = vmul.f32 %v1620, %v1624
        %vm1626 = vweird.f32 %v1585
        %vm1627 = vweird.f32 %v1620
        %vm1628 = vmor %vm1626, %vm1627
        %v1629 = vsel %vm1628, %v1620, %v1625
        %v1630 = vrsqrt.pop %v1586
        %v1631 = vmul.f32 %v1630, %v1586
        %v1632 = vmul.f32 %v1631, %v1630
        %v1633 = vmul.f32 0.5, %v1632
        %v1634 = vsub.f32 1.5, %v1633
        %v1635 = vmul.f32 %v1630, %v1634
        %vm1636 = vweird.f32 %v1586
        %vm1637 = vweird.f32 %v1630
        %vm1638 = vmor %vm1636, %vm1637
        %v1639 = vsel %vm1638, %v1630, %v1635
        %v1640 = vrsqrt.pop %v1587
        %v1641 = vmul.f32 %v1640, %v1587
        %v1642 = vmul.f32 %v1641, %v1640
        %v1643 = vmul.f32 0.5, %v1642
        %v1644 = vsub.f32 1.5, %v1643
        %v1645 = vmul.f32 %v1640, %v1644
        %vm1646 = vweird.f32 %v1587
        %vm1647 = vweird.f32 %v1640
        %vm1648 = vmor %vm1646, %vm1647
        %v1649 = vsel %vm1648, %v1640, %v1645
        %v1650 = vrsqrt.pop %v1588
        %v1651 = vmul.f32 %v1650, %v1588
        %v1652 = vmul.f32 %v1651, %v1650
        %v1653 = vmul.f32 0.5, %v1652
        %v1654 = vsub.f32 1.5, %v1653
        %v1655 = vmul.f32 %v1650, %v1654
        %vm1656 = vweird.f32 %v1588
        %vm1657 = vweird.f32 %v1650
        %vm1658 = vmor %vm1656, %vm1657
        %v1659 = vsel %vm1658, %v1650, %v1655
        %v1660 = vrsqrt.pop %v1589
        %v1661 = vmul.f32 %v1660, %v1589
        %v1662 = vmul.f32 %v1661, %v1660
        %v1663 = vmul.f32 0.5, %v1662
        %v1664 = vsub.f32 1.5, %v1663
        %v1665 = vmul.f32 %v1660, %v1664
        %vm1666 = vweird.f32 %v1589
        %vm1667 = vweird.f32 %v1660
        %vm1668 = vmor %vm1666, %vm1667
        %v1669 = vsel %vm1668, %v1660, %v1665
        %v1670 = vmul.f32 %v1542, %v1599
        %v1671 = vmul.f32 %v1543, %v1609
        %v1672 = vmul.f32 %v1544, %v1619
        %v1673 = vmul.f32 %v1545, %v1629
        %v1674 = vmul.f32 %v1546, %v1639
        %v1675 = vmul.f32 %v1547, %v1649
        %v1676 = vmul.f32 %v1548, %v1659
        %v1677 = vmul.f32 %v1549, %v1669
        %v1678 = vperm.slane %v555, 2
        %v1679 = vmul.f32 %v1670, %v1678
        %v1680 = vmul.f32 %v1671, %v1678
        %v1681 = vmul.f32 %v1672, %v1678
        %v1682 = vmul.f32 %v1673, %v1678
        %v1683 = vmul.f32 %v1674, %v1678
        %v1684 = vmul.f32 %v1675, %v1678
        %v1685 = vmul.f32 %v1676, %v1678
        %v1686 = vmul.f32 %v1677, %v1678
        %v1687 = vperm.slane %v555, 3
        %v1688 = vadd.f32 %v1679, %v1687
        %v1689 = vadd.f32 %v1680, %v1687
        %v1690 = vadd.f32 %v1681, %v1687
        %v1691 = vadd.f32 %v1682, %v1687
        %v1692 = vadd.f32 %v1683, %v1687
        %v1693 = vadd.f32 %v1684, %v1687
        %v1694 = vadd.f32 %v1685, %v1687
        %v1695 = vadd.f32 %v1686, %v1687
        %v1696 = vpack.c.bf16 %v1689, %v1688
        %v1697 = vpack.c.bf16 %v1691, %v1690
        %v1698 = vpack.c.bf16 %v1693, %v1692
        %v1699 = vpack.c.bf16 %v1695, %v1694
        %v1700 = vld [vmem:[%s440] sm:$0xff]
        %v1701 = vld [vmem:[%s440 + $0x8] sm:$0xff]
        %v1702 = vld [vmem:[%s440 + $0x10] sm:$0xff]
        %v1703 = vld [vmem:[%s440 + $0x18] sm:$0xff]
        %v1704 = vld [vmem:[%s440 + $0x20] sm:$0xff]
        %v1705 = vld [vmem:[%s440 + $0x28] sm:$0xff]
        %v1706 = vld [vmem:[%s440 + $0x30] sm:$0xff]
        %v1707 = vld [vmem:[%s440 + $0x38] sm:$0xff]
        %v1708 = vld [vmem:[%s440 + $0x40] sm:$0xff]
        %v1709 = vld [vmem:[%s440 + $0x48] sm:$0xff]
        %v1710 = vld [vmem:[%s440 + $0x50] sm:$0xff]
        %v1711 = vld [vmem:[%s440 + $0x58] sm:$0xff]
        %v1712 = vld [vmem:[%s440 + $0x60] sm:$0xff]
        %v1713 = vld [vmem:[%s440 + $0x68] sm:$0xff]
        %v1714 = vld [vmem:[%s440 + $0x70] sm:$0xff]
        %v1715 = vld [vmem:[%s440 + $0x78] sm:$0xff]
        %v1716 = vld [vmem:[%s524] sm:$0x3]
        %v1718 = vperm.slane %v1716, 0
        %v1719 = vperm.slane %v1716, 1
        %v1738 = vunpack.c.l.b16 %v1700
        %v1739 = vunpack.c.h.b16 %v1700
        %v1740 = vunpack.c.l.b16 %v1701
        %v1741 = vunpack.c.h.b16 %v1701
        %v1742 = vunpack.c.l.b16 %v1702
        %v1743 = vunpack.c.h.b16 %v1702
        %v1744 = vunpack.c.l.b16 %v1703
        %v1745 = vunpack.c.h.b16 %v1703
        %v1746 = vunpack.c.l.b16 %v1704
        %v1747 = vunpack.c.h.b16 %v1704
        %v1748 = vunpack.c.l.b16 %v1705
        %v1749 = vunpack.c.h.b16 %v1705
        %v1750 = vunpack.c.l.b16 %v1706
        %v1751 = vunpack.c.h.b16 %v1706
        %v1752 = vunpack.c.l.b16 %v1707
        %v1753 = vunpack.c.h.b16 %v1707
        %v1754 = vunpack.c.l.b16 %v1708
        %v1755 = vunpack.c.h.b16 %v1708
        %v1756 = vunpack.c.l.b16 %v1709
        %v1757 = vunpack.c.h.b16 %v1709
        %v1758 = vunpack.c.l.b16 %v1710
        %v1759 = vunpack.c.h.b16 %v1710
        %v1760 = vunpack.c.l.b16 %v1711
        %v1761 = vunpack.c.h.b16 %v1711
        %v1762 = vunpack.c.l.b16 %v1712
        %v1763 = vunpack.c.h.b16 %v1712
        %v1764 = vunpack.c.l.b16 %v1713
        %v1765 = vunpack.c.h.b16 %v1713
        %v1766 = vunpack.c.l.b16 %v1714
        %v1767 = vunpack.c.h.b16 %v1714
        %v1768 = vunpack.c.l.b16 %v1715
        %v1769 = vunpack.c.h.b16 %v1715
        %v1770 = vpack.c.b16 %v1740, %v1738
        %v1771 = vpack.c.b16 %v1741, %v1739
        %v1772 = vpack.c.b16 %v1744, %v1742
        %v1773 = vpack.c.b16 %v1745, %v1743
        %v1774 = vpack.c.b16 %v1748, %v1746
        %v1775 = vpack.c.b16 %v1749, %v1747
        %v1776 = vpack.c.b16 %v1752, %v1750
        %v1777 = vpack.c.b16 %v1753, %v1751
        %v1778 = vpack.c.b16 %v1756, %v1754
        %v1779 = vpack.c.b16 %v1757, %v1755
        %v1780 = vpack.c.b16 %v1760, %v1758
        %v1781 = vpack.c.b16 %v1761, %v1759
        %v1782 = vpack.c.b16 %v1764, %v1762
        %v1783 = vpack.c.b16 %v1765, %v1763
        %v1784 = vpack.c.b16 %v1768, %v1766
        %v1785 = vpack.c.b16 %v1769, %v1767
        %1802 = vmatpush.bf16.msra.mxu0 %v1784
        %1803 = vmatpush.bf16.msra.mxu0 %v1782
        %1804 = vmatpush.bf16.msra.mxu0 %v1780
        %1805 = vmatpush.bf16.msra.mxu0 %v1778
        %1806 = vmatpush.bf16.msra.mxu0 %v1776
        %1807 = vmatpush.bf16.msra.mxu0 %v1774
        %1808 = vmatpush.bf16.msra.mxu0 %v1772
        %1809 = vmatpush.bf16.msra.mxu0 %v1770
        %1810 = vmatmul.bf16.gmra.mxu0 %v1696
        %v1811 = vpop.f32.mrf.mxu0
        %v1812 = vadd.f32 %v1718, %v1811
        %v1813 = vpop.f32.mrf.mxu0
        %v1814 = vadd.f32 %v1718, %v1813
        %1815 = vmatmul.bf16.gmra.mxu0 %v1697
        %v1816 = vpop.f32.mrf.mxu0
        %v1817 = vadd.f32 %v1718, %v1816
        %v1818 = vpop.f32.mrf.mxu0
        %v1819 = vadd.f32 %v1718, %v1818
        %1820 = vmatmul.bf16.gmra.mxu0 %v1698
        %v1821 = vpop.f32.mrf.mxu0
        %v1822 = vadd.f32 %v1718, %v1821
        %v1823 = vpop.f32.mrf.mxu0
        %v1824 = vadd.f32 %v1718, %v1823
        %1825 = vmatmul.bf16.gmra.mxu0 %v1699
        %v1826 = vpop.f32.mrf.mxu0
        %v1827 = vadd.f32 %v1718, %v1826
        %v1828 = vpop.f32.mrf.mxu0
        %v1829 = vadd.f32 %v1718, %v1828
        %1830 = vdwg.mxu0
        %1831 = vmatpush.bf16.msra.mxu0 %v1785
        %1832 = vmatpush.bf16.msra.mxu0 %v1783
        %1833 = vmatpush.bf16.msra.mxu0 %v1781
        %1834 = vmatpush.bf16.msra.mxu0 %v1779
        %1835 = vmatpush.bf16.msra.mxu0 %v1777
        %1836 = vmatpush.bf16.msra.mxu0 %v1775
        %1837 = vmatpush.bf16.msra.mxu0 %v1773
        %1838 = vmatpush.bf16.msra.mxu0 %v1771
        %1839 = vmatmul.bf16.gmra.mxu0 %v1696
        %v1840 = vpop.f32.mrf.mxu0
        %v1841 = vadd.f32 %v1719, %v1840
        %v1842 = vpop.f32.mrf.mxu0
        %v1843 = vadd.f32 %v1719, %v1842
        %1844 = vmatmul.bf16.gmra.mxu0 %v1697
        %v1845 = vpop.f32.mrf.mxu0
        %v1846 = vadd.f32 %v1719, %v1845
        %v1847 = vpop.f32.mrf.mxu0
        %v1848 = vadd.f32 %v1719, %v1847
        %1849 = vmatmul.bf16.gmra.mxu0 %v1698
        %v1850 = vpop.f32.mrf.mxu0
        %v1851 = vadd.f32 %v1719, %v1850
        %v1852 = vpop.f32.mrf.mxu0
        %v1853 = vadd.f32 %v1719, %v1852
        %1854 = vmatmul.bf16.gmra.mxu0 %v1699
        %v1855 = vpop.f32.mrf.mxu0
        %v1856 = vadd.f32 %v1719, %v1855
        %v1857 = vpop.f32.mrf.mxu0
        %v1858 = vadd.f32 %v1719, %v1857
        %1859 = vdwg.mxu0
        %v1860 = vmax.f32 %v1812, 0.0
        %v1861 = vmax.f32 %v1841, 0.0
        %v1862 = vmax.f32 %v1814, 0.0
        %v1863 = vmax.f32 %v1843, 0.0
        %v1864 = vmax.f32 %v1817, 0.0
        %v1865 = vmax.f32 %v1846, 0.0
        %v1866 = vmax.f32 %v1819, 0.0
        %v1867 = vmax.f32 %v1848, 0.0
        %v1868 = vmax.f32 %v1822, 0.0
        %v1869 = vmax.f32 %v1851, 0.0
        %v1870 = vmax.f32 %v1824, 0.0
        %v1871 = vmax.f32 %v1853, 0.0
        %v1872 = vmax.f32 %v1827, 0.0
        %v1873 = vmax.f32 %v1856, 0.0
        %v1874 = vmax.f32 %v1829, 0.0
        %v1875 = vmax.f32 %v1858, 0.0
        %v1876 = vpack.c.bf16 %v1862, %v1860
        %v1877 = vpack.c.bf16 %v1863, %v1861
        %v1878 = vpack.c.bf16 %v1866, %v1864
        %v1879 = vpack.c.bf16 %v1867, %v1865
        %v1880 = vpack.c.bf16 %v1870, %v1868
        %v1881 = vpack.c.bf16 %v1871, %v1869
        %v1882 = vpack.c.bf16 %v1874, %v1872
        %v1883 = vpack.c.bf16 %v1875, %v1873
        %v1884 = vld [vmem:[%s450] sm:$0xf]
        %v1885 = vld [vmem:[%s450 + $0x4] sm:$0xf]
        %v1886 = vld [vmem:[%s450 + $0x8] sm:$0xf]
        %v1887 = vld [vmem:[%s450 + $0xc] sm:$0xf]
        %v1888 = vld [vmem:[%s450 + $0x10] sm:$0xf]
        %v1889 = vld [vmem:[%s450 + $0x14] sm:$0xf]
        %v1890 = vld [vmem:[%s450 + $0x18] sm:$0xf]
        %v1891 = vld [vmem:[%s450 + $0x1c] sm:$0xf]
        %v1892 = vld [vmem:[%s450 + $0x20] sm:$0xf]
        %v1893 = vld [vmem:[%s450 + $0x24] sm:$0xf]
        %v1894 = vld [vmem:[%s450 + $0x28] sm:$0xf]
        %v1895 = vld [vmem:[%s450 + $0x2c] sm:$0xf]
        %v1896 = vld [vmem:[%s450 + $0x30] sm:$0xf]
        %v1897 = vld [vmem:[%s450 + $0x34] sm:$0xf]
        %v1898 = vld [vmem:[%s450 + $0x38] sm:$0xf]
        %v1899 = vld [vmem:[%s450 + $0x3c] sm:$0xf]
        %v1900 = vld [vmem:[%s450 + $0x40] sm:$0xf]
        %v1901 = vld [vmem:[%s450 + $0x44] sm:$0xf]
        %v1902 = vld [vmem:[%s450 + $0x48] sm:$0xf]
        %v1903 = vld [vmem:[%s450 + $0x4c] sm:$0xf]
        %v1904 = vld [vmem:[%s450 + $0x50] sm:$0xf]
        %v1905 = vld [vmem:[%s450 + $0x54] sm:$0xf]
        %v1906 = vld [vmem:[%s450 + $0x58] sm:$0xf]
        %v1907 = vld [vmem:[%s450 + $0x5c] sm:$0xf]
        %v1908 = vld [vmem:[%s450 + $0x60] sm:$0xf]
        %v1909 = vld [vmem:[%s450 + $0x64] sm:$0xf]
        %v1910 = vld [vmem:[%s450 + $0x68] sm:$0xf]
        %v1911 = vld [vmem:[%s450 + $0x6c] sm:$0xf]
        %v1912 = vld [vmem:[%s450 + $0x70] sm:$0xf]
        %v1913 = vld [vmem:[%s450 + $0x74] sm:$0xf]
        %v1914 = vld [vmem:[%s450 + $0x78] sm:$0xf]
        %v1915 = vld [vmem:[%s450 + $0x7c] sm:$0xf]
        %v1948 = vunpack.c.l.b16 %v1884
        %v1949 = vunpack.c.l.b16 %v1885
        %v1950 = vunpack.c.l.b16 %v1886
        %v1951 = vunpack.c.l.b16 %v1887
        %v1952 = vunpack.c.l.b16 %v1888
        %v1953 = vunpack.c.l.b16 %v1889
        %v1954 = vunpack.c.l.b16 %v1890
        %v1955 = vunpack.c.l.b16 %v1891
        %v1956 = vunpack.c.l.b16 %v1892
        %v1957 = vunpack.c.l.b16 %v1893
        %v1958 = vunpack.c.l.b16 %v1894
        %v1959 = vunpack.c.l.b16 %v1895
        %v1960 = vunpack.c.l.b16 %v1896
        %v1961 = vunpack.c.l.b16 %v1897
        %v1962 = vunpack.c.l.b16 %v1898
        %v1963 = vunpack.c.l.b16 %v1899
        %v1964 = vunpack.c.l.b16 %v1900
        %v1965 = vunpack.c.l.b16 %v1901
        %v1966 = vunpack.c.l.b16 %v1902
        %v1967 = vunpack.c.l.b16 %v1903
        %v1968 = vunpack.c.l.b16 %v1904
        %v1969 = vunpack.c.l.b16 %v1905
        %v1970 = vunpack.c.l.b16 %v1906
        %v1971 = vunpack.c.l.b16 %v1907
        %v1972 = vunpack.c.l.b16 %v1908
        %v1973 = vunpack.c.l.b16 %v1909
        %v1974 = vunpack.c.l.b16 %v1910
        %v1975 = vunpack.c.l.b16 %v1911
        %v1976 = vunpack.c.l.b16 %v1912
        %v1977 = vunpack.c.l.b16 %v1913
        %v1978 = vunpack.c.l.b16 %v1914
        %v1979 = vunpack.c.l.b16 %v1915
        %v1980 = vpack.c.b16 %v1949, %v1948
        %v1981 = vpack.c.b16 %v1951, %v1950
        %v1982 = vpack.c.b16 %v1953, %v1952
        %v1983 = vpack.c.b16 %v1955, %v1954
        %v1984 = vpack.c.b16 %v1957, %v1956
        %v1985 = vpack.c.b16 %v1959, %v1958
        %v1986 = vpack.c.b16 %v1961, %v1960
        %v1987 = vpack.c.b16 %v1963, %v1962
        %v1988 = vpack.c.b16 %v1965, %v1964
        %v1989 = vpack.c.b16 %v1967, %v1966
        %v1990 = vpack.c.b16 %v1969, %v1968
        %v1991 = vpack.c.b16 %v1971, %v1970
        %v1992 = vpack.c.b16 %v1973, %v1972
        %v1993 = vpack.c.b16 %v1975, %v1974
        %v1994 = vpack.c.b16 %v1977, %v1976
        %v1995 = vpack.c.b16 %v1979, %v1978
        %2012 = vmatpush.bf16.msra.mxu0 %v1987
        %2013 = vmatpush.bf16.msra.mxu0 %v1986
        %2014 = vmatpush.bf16.msra.mxu0 %v1985
        %2015 = vmatpush.bf16.msra.mxu0 %v1984
        %2016 = vmatpush.bf16.msra.mxu0 %v1983
        %2017 = vmatpush.bf16.msra.mxu0 %v1982
        %2018 = vmatpush.bf16.msra.mxu0 %v1981
        %2019 = vmatpush.bf16.msra.mxu0 %v1980
        %2020 = vmatmul.bf16.gmra.mxu0 %v1876
        %v2021 = vpop.f32.mrf.mxu0
        %v2022 = vadd.f32 0.0, %v2021
        %v2023 = vpop.f32.mrf.mxu0
        %v2024 = vadd.f32 0.0, %v2023
        %2025 = vmatmul.bf16.gmra.mxu0 %v1878
        %v2026 = vpop.f32.mrf.mxu0
        %v2027 = vadd.f32 0.0, %v2026
        %v2028 = vpop.f32.mrf.mxu0
        %v2029 = vadd.f32 0.0, %v2028
        %2030 = vmatmul.bf16.gmra.mxu0 %v1880
        %v2031 = vpop.f32.mrf.mxu0
        %v2032 = vadd.f32 0.0, %v2031
        %v2033 = vpop.f32.mrf.mxu0
        %v2034 = vadd.f32 0.0, %v2033
        %2035 = vmatmul.bf16.gmra.mxu0 %v1882
        %v2036 = vpop.f32.mrf.mxu0
        %v2037 = vadd.f32 0.0, %v2036
        %v2038 = vpop.f32.mrf.mxu0
        %v2039 = vadd.f32 0.0, %v2038
        %2040 = vdwg.mxu0
        %2041 = vmatpush.bf16.msra.mxu0 %v1995
        %2042 = vmatpush.bf16.msra.mxu0 %v1994
        %2043 = vmatpush.bf16.msra.mxu0 %v1993
        %2044 = vmatpush.bf16.msra.mxu0 %v1992
        %2045 = vmatpush.bf16.msra.mxu0 %v1991
        %2046 = vmatpush.bf16.msra.mxu0 %v1990
        %2047 = vmatpush.bf16.msra.mxu0 %v1989
        %2048 = vmatpush.bf16.msra.mxu0 %v1988
        %2049 = vmatmul.bf16.gmra.mxu0 %v1877
        %v2050 = vpop.f32.mrf.mxu0
        %v2051 = vadd.f32 %v2022, %v2050
        %v2052 = vpop.f32.mrf.mxu0
        %v2053 = vadd.f32 %v2024, %v2052
        %2054 = vmatmul.bf16.gmra.mxu0 %v1879
        %v2055 = vpop.f32.mrf.mxu0
        %v2056 = vadd.f32 %v2027, %v2055
        %v2057 = vpop.f32.mrf.mxu0
        %v2058 = vadd.f32 %v2029, %v2057
        %2059 = vmatmul.bf16.gmra.mxu0 %v1881
        %v2060 = vpop.f32.mrf.mxu0
        %v2061 = vadd.f32 %v2032, %v2060
        %v2062 = vpop.f32.mrf.mxu0
        %v2063 = vadd.f32 %v2034, %v2062
        %2064 = vmatmul.bf16.gmra.mxu0 %v1883
        %v2065 = vpop.f32.mrf.mxu0
        %v2066 = vadd.f32 %v2037, %v2065
        %v2067 = vpop.f32.mrf.mxu0
        %v2068 = vadd.f32 %v2039, %v2067
        %2069 = vdwg.mxu0
        %v2070 = vadd.f32 %v1510, %v2051
        %v2071 = vadd.f32 %v1511, %v2053
        %v2072 = vadd.f32 %v1512, %v2056
        %v2073 = vadd.f32 %v1513, %v2058
        %v2074 = vadd.f32 %v1514, %v2061
        %v2075 = vadd.f32 %v1515, %v2063
        %v2076 = vadd.f32 %v1516, %v2066
        %v2077 = vadd.f32 %v1517, %v2068
        %v2078 = vperm.slane %v556, 0
        %v2079 = vadd.f32 %v2070, %v2078
        %v2080 = vadd.f32 %v2071, %v2078
        %v2081 = vadd.f32 %v2072, %v2078
        %v2082 = vadd.f32 %v2073, %v2078
        %v2083 = vadd.f32 %v2074, %v2078
        %v2084 = vadd.f32 %v2075, %v2078
        %v2085 = vadd.f32 %v2076, %v2078
        %v2086 = vadd.f32 %v2077, %v2078
        %2087 = vst [vmem:[#allocation2] sm:$0xff] %v2079
        %2088 = vst [vmem:[#allocation2 + $0x8] sm:$0xff] %v2080
        %2089 = vst [vmem:[#allocation2 + $0x10] sm:$0xff] %v2081
        %2090 = vst [vmem:[#allocation2 + $0x18] sm:$0xff] %v2082
        %2091 = vst [vmem:[#allocation2 + $0x20] sm:$0xff] %v2083
        %2092 = vst [vmem:[#allocation2 + $0x28] sm:$0xff] %v2084
        %2093 = vst [vmem:[#allocation2 + $0x30] sm:$0xff] %v2085
        %2094 = vst [vmem:[#allocation2 + $0x38] sm:$0xff] %v2086
        %p2095 = scmp.eq.s32.totalorder %s43, 2
        // Predicated region
        $region73: #{tpu_custom_call.1} parent=51 // pred_check
          %p2096 = pneg %p2095
        $region74: #{tpu_custom_call.1} parent=51 // pred_check_branch
          %2098 = sbr.rel (%p2096) target = $region76
        $region75: #{tpu_custom_call.1} parent=51 // pred_region
          %v2099 = vld [vmem:[%s8] sm:$0x1]
          %v2100 = vld [vmem:[%s8 + $0x1] sm:$0x1]
          %2101 = vadd.xlane.f32.xlu0 %v2079
          %v2102 = vpop.xlane.xlu0 %2101
          %2103 = vadd.xlane.f32.xlu0 %v2080
          %v2104 = vpop.xlane.xlu0 %2103
          %2105 = vadd.xlane.f32.xlu0 %v2081
          %v2106 = vpop.xlane.xlu0 %2105
          %2107 = vadd.xlane.f32.xlu0 %v2082
          %v2108 = vpop.xlane.xlu0 %2107
          %2109 = vadd.xlane.f32.xlu0 %v2083
          %v2110 = vpop.xlane.xlu0 %2109
          %2111 = vadd.xlane.f32.xlu0 %v2084
          %v2112 = vpop.xlane.xlu0 %2111
          %2113 = vadd.xlane.f32.xlu0 %v2085
          %v2114 = vpop.xlane.xlu0 %2113
          %2115 = vadd.xlane.f32.xlu0 %v2086
          %v2116 = vpop.xlane.xlu0 %2115
          %v2117 = vmul.f32 %v2102, %v610
          %v2118 = vmul.f32 %v2104, %v610
          %v2119 = vmul.f32 %v2106, %v610
          %v2120 = vmul.f32 %v2108, %v610
          %v2121 = vmul.f32 %v2110, %v610
          %v2122 = vmul.f32 %v2112, %v610
          %v2123 = vmul.f32 %v2114, %v610
          %v2124 = vmul.f32 %v2116, %v610
          %v2125 = vsub.f32 %v2079, %v2117
          %v2126 = vsub.f32 %v2080, %v2118
          %v2127 = vsub.f32 %v2081, %v2119
          %v2128 = vsub.f32 %v2082, %v2120
          %v2129 = vsub.f32 %v2083, %v2121
          %v2130 = vsub.f32 %v2084, %v2122
          %v2131 = vsub.f32 %v2085, %v2123
          %v2132 = vsub.f32 %v2086, %v2124
          %v2133 = vmul.f32 %v2125, %v2125
          %v2134 = vmul.f32 %v2126, %v2126
          %v2135 = vmul.f32 %v2127, %v2127
          %v2136 = vmul.f32 %v2128, %v2128
          %v2137 = vmul.f32 %v2129, %v2129
          %v2138 = vmul.f32 %v2130, %v2130
          %v2139 = vmul.f32 %v2131, %v2131
          %v2140 = vmul.f32 %v2132, %v2132
          %2141 = vadd.xlane.f32.xlu0 %v2133
          %v2142 = vpop.xlane.xlu0 %2141
          %2143 = vadd.xlane.f32.xlu0 %v2134
          %v2144 = vpop.xlane.xlu0 %2143
          %2145 = vadd.xlane.f32.xlu0 %v2135
          %v2146 = vpop.xlane.xlu0 %2145
          %2147 = vadd.xlane.f32.xlu0 %v2136
          %v2148 = vpop.xlane.xlu0 %2147
          %2149 = vadd.xlane.f32.xlu0 %v2137
          %v2150 = vpop.xlane.xlu0 %2149
          %2151 = vadd.xlane.f32.xlu0 %v2138
          %v2152 = vpop.xlane.xlu0 %2151
          %2153 = vadd.xlane.f32.xlu0 %v2139
          %v2154 = vpop.xlane.xlu0 %2153
          %2155 = vadd.xlane.f32.xlu0 %v2140
          %v2156 = vpop.xlane.xlu0 %2155
          %v2157 = vmul.f32 %v2142, %v610
          %v2158 = vmul.f32 %v2144, %v610
          %v2159 = vmul.f32 %v2146, %v610
          %v2160 = vmul.f32 %v2148, %v610
          %v2161 = vmul.f32 %v2150, %v610
          %v2162 = vmul.f32 %v2152, %v610
          %v2163 = vmul.f32 %v2154, %v610
          %v2164 = vmul.f32 %v2156, %v610
          %v2165 = vadd.f32 %v2157, 1e-05
          %v2166 = vadd.f32 %v2158, 1e-05
          %v2167 = vadd.f32 %v2159, 1e-05
          %v2168 = vadd.f32 %v2160, 1e-05
          %v2169 = vadd.f32 %v2161, 1e-05
          %v2170 = vadd.f32 %v2162, 1e-05
          %v2171 = vadd.f32 %v2163, 1e-05
          %v2172 = vadd.f32 %v2164, 1e-05
          %v2173 = vrsqrt.pop %v2165
          %v2174 = vmul.f32 %v2173, %v2165
          %v2175 = vmul.f32 %v2174, %v2173
          %v2176 = vmul.f32 0.5, %v2175
          %v2177 = vsub.f32 1.5, %v2176
          %v2178 = vmul.f32 %v2173, %v2177
          %vm2179 = vweird.f32 %v2165
          %vm2180 = vweird.f32 %v2173
          %vm2181 = vmor %vm2179, %vm2180
          %v2182 = vsel %vm2181, %v2173, %v2178
          %v2183 = vrsqrt.pop %v2166
          %v2184 = vmul.f32 %v2183, %v2166
          %v2185 = vmul.f32 %v2184, %v2183
          %v2186 = vmul.f32 0.5, %v2185
          %v2187 = vsub.f32 1.5, %v2186
          %v2188 = vmul.f32 %v2183, %v2187
          %vm2189 = vweird.f32 %v2166
          %vm2190 = vweird.f32 %v2183
          %vm2191 = vmor %vm2189, %vm2190
          %v2192 = vsel %vm2191, %v2183, %v2188
          %v2193 = vrsqrt.pop %v2167
          %v2194 = vmul.f32 %v2193, %v2167
          %v2195 = vmul.f32 %v2194, %v2193
          %v2196 = vmul.f32 0.5, %v2195
          %v2197 = vsub.f32 1.5, %v2196
          %v2198 = vmul.f32 %v2193, %v2197
          %vm2199 = vweird.f32 %v2167
          %vm2200 = vweird.f32 %v2193
          %vm2201 = vmor %vm2199, %vm2200
          %v2202 = vsel %vm2201, %v2193, %v2198
          %v2203 = vrsqrt.pop %v2168
          %v2204 = vmul.f32 %v2203, %v2168
          %v2205 = vmul.f32 %v2204, %v2203
          %v2206 = vmul.f32 0.5, %v2205
          %v2207 = vsub.f32 1.5, %v2206
          %v2208 = vmul.f32 %v2203, %v2207
          %vm2209 = vweird.f32 %v2168
          %vm2210 = vweird.f32 %v2203
          %vm2211 = vmor %vm2209, %vm2210
          %v2212 = vsel %vm2211, %v2203, %v2208
          %v2213 = vrsqrt.pop %v2169
          %v2214 = vmul.f32 %v2213, %v2169
          %v2215 = vmul.f32 %v2214, %v2213
          %v2216 = vmul.f32 0.5, %v2215
          %v2217 = vsub.f32 1.5, %v2216
          %v2218 = vmul.f32 %v2213, %v2217
          %vm2219 = vweird.f32 %v2169
          %vm2220 = vweird.f32 %v2213
          %vm2221 = vmor %vm2219, %vm2220
          %v2222 = vsel %vm2221, %v2213, %v2218
          %v2223 = vrsqrt.pop %v2170
          %v2224 = vmul.f32 %v2223, %v2170
          %v2225 = vmul.f32 %v2224, %v2223
          %v2226 = vmul.f32 0.5, %v2225
          %v2227 = vsub.f32 1.5, %v2226
          %v2228 = vmul.f32 %v2223, %v2227
          %vm2229 = vweird.f32 %v2170
          %vm2230 = vweird.f32 %v2223
          %vm2231 = vmor %vm2229, %vm2230
          %v2232 = vsel %vm2231, %v2223, %v2228
          %v2233 = vrsqrt.pop %v2171
          %v2234 = vmul.f32 %v2233, %v2171
          %v2235 = vmul.f32 %v2234, %v2233
          %v2236 = vmul.f32 0.5, %v2235
          %v2237 = vsub.f32 1.5, %v2236
          %v2238 = vmul.f32 %v2233, %v2237
          %vm2239 = vweird.f32 %v2171
          %vm2240 = vweird.f32 %v2233
          %vm2241 = vmor %vm2239, %vm2240
          %v2242 = vsel %vm2241, %v2233, %v2238
          %v2243 = vrsqrt.pop %v2172
          %v2244 = vmul.f32 %v2243, %v2172
          %v2245 = vmul.f32 %v2244, %v2243
          %v2246 = vmul.f32 0.5, %v2245
          %v2247 = vsub.f32 1.5, %v2246
          %v2248 = vmul.f32 %v2243, %v2247
          %vm2249 = vweird.f32 %v2172
          %vm2250 = vweird.f32 %v2243
          %vm2251 = vmor %vm2249, %vm2250
          %v2252 = vsel %vm2251, %v2243, %v2248
          %v2253 = vmul.f32 %v2125, %v2182
          %v2254 = vmul.f32 %v2126, %v2192
          %v2255 = vmul.f32 %v2127, %v2202
          %v2256 = vmul.f32 %v2128, %v2212
          %v2257 = vmul.f32 %v2129, %v2222
          %v2258 = vmul.f32 %v2130, %v2232
          %v2259 = vmul.f32 %v2131, %v2242
          %v2260 = vmul.f32 %v2132, %v2252
          %v2261 = vperm.slane %v2099, 0
          %v2262 = vmul.f32 %v2253, %v2261
          %v2263 = vmul.f32 %v2254, %v2261
          %v2264 = vmul.f32 %v2255, %v2261
          %v2265 = vmul.f32 %v2256, %v2261
          %v2266 = vmul.f32 %v2257, %v2261
          %v2267 = vmul.f32 %v2258, %v2261
          %v2268 = vmul.f32 %v2259, %v2261
          %v2269 = vmul.f32 %v2260, %v2261
          %v2270 = vperm.slane %v2100, 0
          %v2271 = vadd.f32 %v2262, %v2270
          %v2272 = vadd.f32 %v2263, %v2270
          %v2273 = vadd.f32 %v2264, %v2270
          %v2274 = vadd.f32 %v2265, %v2270
          %v2275 = vadd.f32 %v2266, %v2270
          %v2276 = vadd.f32 %v2267, %v2270
          %v2277 = vadd.f32 %v2268, %v2270
          %v2278 = vadd.f32 %v2269, %v2270
          %2279 = vst [vmem:[#allocation13] sm:$0xff] %v2271
          %2280 = vst [vmem:[#allocation13 + $0x8] sm:$0xff] %v2272
          %2281 = vst [vmem:[#allocation13 + $0x10] sm:$0xff] %v2273
          %2282 = vst [vmem:[#allocation13 + $0x18] sm:$0xff] %v2274
          %2283 = vst [vmem:[#allocation13 + $0x20] sm:$0xff] %v2275
          %2284 = vst [vmem:[#allocation13 + $0x28] sm:$0xff] %v2276
          %2285 = vst [vmem:[#allocation13 + $0x30] sm:$0xff] %v2277
          %2286 = vst [vmem:[#allocation13 + $0x38] sm:$0xff] %v2278
        $region76: #{tpu_custom_call.1} parent=51 // pred_fallthru
          _
        // Predicated region
        $region77: #{tpu_custom_call.1} parent=51 // pred_check
          %p2287 = pneg %p271
        $region78: #{tpu_custom_call.1} parent=51 // pred_check_branch
          %2289 = sbr.rel (%p2287) target = $region80
        $region79: #{tpu_custom_call.1} parent=51 // pred_region
          %s2290 = smul.u32 4, %s42
          %2292 = vsyncadd [#allocation7], 0
          %s2293 = smul.addr %s2290, 2
          %s2294 = smul.addr %s2293, 8
          %s2295 = scalar_lea.hbm %s9, %s2294
          %s2296 = sshll.u32 [#allocation13], 4
          %s2297 = int_to_ptr.vmem [resolvable:$true] %s2296
          %s2298 = sshll.u32 %s2295, 4
          %s2299 = int_to_ptr.hbm [resolvable:$true] %s2298
          %2304 = dma.vmem_to_hbm [thread:$0]  %s2297, 1024, %s2299, [#allocation7], 128, 128, 8
        $region80: #{tpu_custom_call.1} parent=51 // pred_fallthru
          _
        // Predicated region
        $region81: #{tpu_custom_call.1} parent=51 // pred_check
          %p2305 = pneg %p271
        $region82: #{tpu_custom_call.1} parent=51 // pred_check_branch
          %2307 = sbr.rel (%p2305) target = $region84
        $region83: #{tpu_custom_call.1} parent=51 // pred_region
          %2309 = dma.done [#allocation7], 1024
        $region84: #{tpu_custom_call.1} parent=51 // pred_fallthru
          _
      $region52: #{tpu_custom_call.1} parent=5 // pred_fallthru
        _
      %p2310 = scmp.le.s32.totalorder 2, %s33
      // Predicated region
      $region85: #{tpu_custom_call.1} parent=5 // pred_check
        %p2311 = pneg %p2310
      $region86: #{tpu_custom_call.1} parent=5 // pred_check_branch
        %2313 = sbr.rel (%p2311) target = $region88
      $region87: #{tpu_custom_call.1} parent=5 // pred_region
        %s2314 = ssub.s32 %s33, 2
      $region88: #{tpu_custom_call.1} parent=5 // pred_fallthru
        _
    $region6: #{tpu_custom_call.1} parent=1 // loop_footer
      %s37 = sadd.s32 1, %s33
    $region7: #{tpu_custom_call.1} parent=1 // loop_footer_branch
      %32 = sbr.rel target = $region3
    $region8: #{tpu_custom_call.1} parent=1 // loop_exit
      _
    %2315 = vsyncpa [#allocation6], 1
    %s2316 = scalar_lea.sflag [#allocation6], 1
    %2317 = vsyncpa %s2316, 1
    %2318 = vsyncpa [#allocation9], 1
    %s2319 = scalar_lea.sflag [#allocation9], 1
    %2320 = vsyncpa %s2319, 1
    %2321 = vsyncpa [#allocation12], 1
    %s2322 = scalar_lea.sflag [#allocation12], 1
    %2323 = vsyncpa %s2322, 1
    %2324 = vsyncpa [#allocation7], 1
    %s2325 = scalar_lea.sflag [#allocation7], 1
    %2326 = vsyncpa %s2325, 1

</llo_original>
